<compile_context>
chip_gen: v7x
topology: tpu7x:2x2x1
jax: 0.10.0
libtpu: 0.0.40
codegen_flags: <defaults>
</compile_context>

<pallas_src>
import functools

import jax
import jax.numpy as jnp
from jax.experimental import pallas as pl
from jax.experimental.pallas import tpu as pltpu


def _round_up(x, m):
    return ((x + m - 1) // m) * m


def _vmem_budget():
    """Returns (single-copy in+out block budget, vmem_limit_bytes), gen-aware."""
    try:
        phys = int(pltpu.get_tpu_info().vmem_capacity_bytes)
    except Exception:
        phys = 64 << 20  # conservative fallback (v7x per-TensorCore VMEM)
    vmem_limit = min(phys * 3 // 4, 96 << 20)
    # 2x double-buffered (in+out) blocks + weights + compiler scratch must fit,
    # so the single-copy block budget is ~1/3 of the scoped limit.
    block_budget = vmem_limit // 3
    return block_budget, vmem_limit


def _basic_conv2d_kernel(x_ref, w_ref, scale_ref, shift_ref, o_ref, *,
                         Nb, Cin, KH, KW, Wp, Q_pad, chunk):
    # x_ref:     (Nb, Cin, L_pad)   bf16 zero-padded, row-flattened images
    # w_ref:     (Cout, KH*KW*Cin)  bf16 weights, tap-major (kh, kw, c) ordering
    # scale_ref: (Cout, 1) f32 BN scale  = gamma / sqrt(var + eps)
    # shift_ref: (Cout, 1) f32 BN shift  = beta - mean * scale
    # o_ref:     (Nb, Cout, Q_pad)  "wide" conv output (valid cols sliced in glue)
    Cout = o_ref.shape[1]
    n_taps = KH * KW

    # Hoisted out of every loop (JAX does not CSE broadcast_in_dim).
    w_taps = [w_ref[:, t * Cin:(t + 1) * Cin] for t in range(n_taps)]  # (Cout,Cin)
    scale = jnp.broadcast_to(scale_ref[...], (Cout, chunk))
    shift = jnp.broadcast_to(shift_ref[...], (Cout, chunk))

    for b in range(Nb):                       # small static unroll over images
        for q0 in range(0, Q_pad, chunk):     # lane-dense spatial chunks
            qs = min(chunk, Q_pad - q0)
            acc = None
            for t in range(n_taps):
                kh, kw = divmod(t, KW)
                off = q0 + kh * Wp + kw
                x_t = x_ref[b, :, off:off + qs]          # (Cin, qs) bf16, contiguous lanes
                d = jnp.dot(w_taps[t], x_t, preferred_element_type=jnp.float32)
                acc = d if acc is None else acc + d      # (Cout, qs) f32
            y = acc * scale[:, :qs] + shift[:, :qs]
            o_ref[b, :, q0:q0 + qs] = jnp.maximum(y, 0.0).astype(o_ref.dtype)


def basic_conv2d(x_nchw, weight, gamma, beta, running_mean, running_var, *,
                 eps=1e-3, stride=1, padding=1, out_dtype=None):
    """Forward of BasicConv2d.  x: (N,Cin,H,W) NCHW.  weight: (Cout,Cin,KH,KW)."""
    if stride != 1:
        raise NotImplementedError("stride != 1 not implemented")  # see TODO above
    N, Cin, H, W = x_nchw.shape
    Cout, _, KH, KW = weight.shape
    pad = int(padding)
    Hp, Wp = H + 2 * pad, W + 2 * pad
    Ho, Wo = Hp - KH + 1, Wp - KW + 1
    # Pass out_dtype=jnp.bfloat16 if the consumer accepts bf16 activations
    # (halves output HBM writes / VMEM output block).
    out_dtype = x_nchw.dtype if out_dtype is None else out_dtype

    # --- inference-mode BN folded to per-channel f32 scale/shift (epilogue) ---
    scale_v = gamma.astype(jnp.float32) / jnp.sqrt(
        running_var.astype(jnp.float32) + eps)
    shift_v = beta.astype(jnp.float32) - running_mean.astype(jnp.float32) * scale_v
    scale = scale_v.reshape(Cout, 1)
    shift = shift_v.reshape(Cout, 1)
    # Weights reordered tap-major (kh, kw, c) to match the in-kernel tap order.
    w2d = (weight.transpose(0, 2, 3, 1).reshape(Cout, KH * KW * Cin)
           .astype(jnp.bfloat16))

    # --- zero-pad + row-flatten the input (no 9x im2col patches tensor) ---
    Q = Ho * Wp                               # "wide" spatial: every output row spans Wp
    Q_pad = _round_up(Q, 128)                 # lane-dense output stores
    max_off = (KH - 1) * Wp + (KW - 1)
    L_pad = _round_up(Q_pad + max_off, 128)
    xb = x_nchw.astype(jnp.bfloat16)
    x_p = jnp.pad(xb, ((0, 0), (0, 0), (pad, pad), (pad, pad)))   # (N,Cin,Hp,Wp)
    x_flat = x_p.reshape(N, Cin, Hp * Wp)
    x_flat = jnp.pad(x_flat, ((0, 0), (0, 0), (0, L_pad - Hp * Wp)))

    # --- blocking: VMEM-budget aware, double-buffer accounted, batch padded ---
    chunk = min(Q_pad, 2048)                  # f32 acc <= Cout*2048*4 (~64 KiB @ Cout=8)
    itemsize = jnp.dtype(out_dtype).itemsize
    per_img = Cin * L_pad * 2 + Cout * Q_pad * itemsize   # in + out block bytes / image
    block_budget, vmem_limit = _vmem_budget()
    Nb = int(max(1, min(N, block_budget // per_img, 8)))  # 8 caps the static unroll
    if Nb >= N and N > 1:
        Nb = (N + 1) // 2                     # keep >= 2 parallel grid steps (v7x 2 TCs)
    N_pad = _round_up(N, Nb)                  # pad batch instead of collapsing Nb
    if N_pad > N:
        x_flat = jnp.pad(x_flat, ((0, N_pad - N), (0, 0), (0, 0)))
    grid = (N_pad // Nb,)

    kernel = functools.partial(_basic_conv2d_kernel, Nb=Nb, Cin=Cin, KH=KH, KW=KW,
                               Wp=Wp, Q_pad=Q_pad, chunk=chunk)

    out_wide = pl.pallas_call(
        kernel,
        out_shape=jax.ShapeDtypeStruct((N_pad, Cout, Q_pad), out_dtype),
        grid_spec=pltpu.PrefetchScalarGridSpec(
            num_scalar_prefetch=0,
            grid=grid,
            in_specs=[
                pl.BlockSpec((Nb, Cin, L_pad), lambda n: (n, 0, 0)),
                pl.BlockSpec((Cout, KH * KW * Cin), lambda n: (0, 0)),
                pl.BlockSpec((Cout, 1), lambda n: (0, 0)),
                pl.BlockSpec((Cout, 1), lambda n: (0, 0)),
            ],
            out_specs=pl.BlockSpec((Nb, Cout, Q_pad), lambda n: (n, 0, 0)),
        ),
        compiler_params=pltpu.CompilerParams(
            dimension_semantics=("parallel",),
            vmem_limit_bytes=int(vmem_limit)),
    )(x_flat, w2d, scale, shift)

    # Valid output columns are q = ho*Wp + wo with wo < Wo; drop garbage + padding.
    out = out_wide[:N, :, :Ho * Wp].reshape(N, Cout, Ho, Wp)[:, :, :, :Wo]
    return out


def _reference(x, weight, gamma, beta, mean, var, *, eps=1e-3, padding=1):
    y = jax.lax.conv_general_dilated(
        x.astype(jnp.float32), weight.astype(jnp.float32),
        window_strides=(1, 1), padding=[(padding, padding), (padding, padding)],
        dimension_numbers=("NCHW", "OIHW", "NCHW"))
    scale = gamma / jnp.sqrt(var + eps)
    shift = beta - mean * scale
    return jnp.maximum(y * scale[None, :, None, None]
                       + shift[None, :, None, None], 0.0)


if __name__ == "__main__":
    # BasicConv2d(in_channels=4, out_channels=8, kernel_size=3, padding=1)
    # applied to a (2, 4, 16, 16) NCHW input.
    N, Cin, H, W = 2, 4, 16, 16
    Cout, KH, KW = 8, 3, 3

    key = jax.random.PRNGKey(0)
    k_x, k_w, k_g, k_b = jax.random.split(key, 4)
    x = jax.random.normal(k_x, (N, Cin, H, W), dtype=jnp.float32)
    weight = jax.random.normal(k_w, (Cout, Cin, KH, KW), dtype=jnp.float32) * 0.1
    gamma = jax.random.normal(k_g, (Cout,), dtype=jnp.float32) * 0.1 + 1.0
    beta = jax.random.normal(k_b, (Cout,), dtype=jnp.float32) * 0.1
    running_mean = jnp.zeros((Cout,), dtype=jnp.float32)
    running_var = jnp.ones((Cout,), dtype=jnp.float32)

    out = basic_conv2d(x, weight, gamma, beta, running_mean, running_var)
    out = jax.block_until_ready(out)

    ref = _reference(x, weight, gamma, beta, running_mean, running_var)
    assert out.shape == (N, Cout, H, W), out.shape
    # bf16 activations/weights (f32 MXU accumulation, f32 BN epilogue)
    assert jnp.allclose(out, ref, atol=5e-2, rtol=5e-2), "mismatch vs reference"
    print("KERNEL_OK")
</pallas_src>

<mosaic_0001>
module attributes {stable_mosaic.version = 11 : i64} {
  func.func @_basic_conv2d_kernel(%arg0: i32, %arg1: memref<1x4x512xbf16, #tpu.memory_space<vmem>>, %arg2: memref<8x36xbf16, #tpu.memory_space<vmem>>, %arg3: memref<8x1xf32, #tpu.memory_space<vmem>>, %arg4: memref<8x1xf32, #tpu.memory_space<vmem>>, %arg5: memref<1x8x384xf32, #tpu.memory_space<vmem>>) attributes {dimension_semantics = [#tpu.dimension_semantics<parallel>], iteration_bounds = array<i64: 2>, scalar_prefetch = 0 : i64, scratch_operands = 0 : i64, tpu.core_type = #tpu.core_type<tc>, window_params = [{transform_indices = @transform_0, window_bounds = array<i64: 1, 4, 512>}, {pipeline_mode = #tpu.pipeline_mode<synchronous>, transform_indices = @transform_1, window_bounds = array<i64: 8, 36>}, {pipeline_mode = #tpu.pipeline_mode<synchronous>, transform_indices = @transform_2, window_bounds = array<i64: 8, 1>}, {pipeline_mode = #tpu.pipeline_mode<synchronous>, transform_indices = @transform_3, window_bounds = array<i64: 8, 1>}, {transform_indices = @transform_4, window_bounds = array<i64: 1, 8, 384>}]} {
    %c0 = arith.constant 0 : index
    %c0_0 = arith.constant 0 : index
    %0 = vector.load %arg2[%c0, %c0_0] : memref<8x36xbf16, #tpu.memory_space<vmem>>, vector<8x4xbf16>
    %c0_1 = arith.constant 0 : index
    %c4 = arith.constant 4 : index
    %1 = vector.load %arg2[%c0_1, %c4] : memref<8x36xbf16, #tpu.memory_space<vmem>>, vector<8x4xbf16>
    %c0_2 = arith.constant 0 : index
    %c8 = arith.constant 8 : index
    %2 = vector.load %arg2[%c0_2, %c8] : memref<8x36xbf16, #tpu.memory_space<vmem>>, vector<8x4xbf16>
    %c0_3 = arith.constant 0 : index
    %c12 = arith.constant 12 : index
    %3 = vector.load %arg2[%c0_3, %c12] : memref<8x36xbf16, #tpu.memory_space<vmem>>, vector<8x4xbf16>
    %c0_4 = arith.constant 0 : index
    %c16 = arith.constant 16 : index
    %4 = vector.load %arg2[%c0_4, %c16] : memref<8x36xbf16, #tpu.memory_space<vmem>>, vector<8x4xbf16>
    %c0_5 = arith.constant 0 : index
    %c20 = arith.constant 20 : index
    %5 = vector.load %arg2[%c0_5, %c20] : memref<8x36xbf16, #tpu.memory_space<vmem>>, vector<8x4xbf16>
    %c0_6 = arith.constant 0 : index
    %c24 = arith.constant 24 : index
    %6 = vector.load %arg2[%c0_6, %c24] : memref<8x36xbf16, #tpu.memory_space<vmem>>, vector<8x4xbf16>
    %c0_7 = arith.constant 0 : index
    %c28 = arith.constant 28 : index
    %7 = vector.load %arg2[%c0_7, %c28] : memref<8x36xbf16, #tpu.memory_space<vmem>>, vector<8x4xbf16>
    %c0_8 = arith.constant 0 : index
    %c32 = arith.constant 32 : index
    %8 = vector.load %arg2[%c0_8, %c32] : memref<8x36xbf16, #tpu.memory_space<vmem>>, vector<8x4xbf16>
    %c0_9 = arith.constant 0 : index
    %c0_10 = arith.constant 0 : index
    %9 = vector.load %arg3[%c0_9, %c0_10] : memref<8x1xf32, #tpu.memory_space<vmem>>, vector<8x1xf32>
    %10 = vector.shape_cast %9 : vector<8x1xf32> to vector<8x1xf32>
    %11 = vector.broadcast %10 : vector<8x1xf32> to vector<8x384xf32>
    %c0_11 = arith.constant 0 : index
    %c0_12 = arith.constant 0 : index
    %12 = vector.load %arg4[%c0_11, %c0_12] : memref<8x1xf32, #tpu.memory_space<vmem>>, vector<8x1xf32>
    %13 = vector.shape_cast %12 : vector<8x1xf32> to vector<8x1xf32>
    %14 = vector.broadcast %13 : vector<8x1xf32> to vector<8x384xf32>
    %c0_13 = arith.constant 0 : index
    %c0_14 = arith.constant 0 : index
    %c0_15 = arith.constant 0 : index
    %15 = vector.load %arg1[%c0_13, %c0_14, %c0_15] : memref<1x4x512xbf16, #tpu.memory_space<vmem>>, vector<1x4x384xbf16>
    %16 = vector.shape_cast %15 : vector<1x4x384xbf16> to vector<4x384xbf16>
    %cst = arith.constant dense<0.000000e+00> : vector<8x384xf32>
    %17 = tpu.matmul %0, %16, %cst {dimension_numbers = #tpu.dot_dimension_numbers<[1], [0], [0], [1], [0, 0, 1, 1], [], []>} : vector<8x4xbf16>, vector<4x384xbf16>, vector<8x384xf32> -> vector<8x384xf32>
    %c0_16 = arith.constant 0 : index
    %c0_17 = arith.constant 0 : index
    %c1 = arith.constant 1 : index
    %18 = vector.load %arg1[%c0_16, %c0_17, %c1] : memref<1x4x512xbf16, #tpu.memory_space<vmem>>, vector<1x4x384xbf16>
    %19 = vector.shape_cast %18 : vector<1x4x384xbf16> to vector<4x384xbf16>
    %cst_18 = arith.constant dense<0.000000e+00> : vector<8x384xf32>
    %20 = tpu.matmul %1, %19, %cst_18 {dimension_numbers = #tpu.dot_dimension_numbers<[1], [0], [0], [1], [0, 0, 1, 1], [], []>} : vector<8x4xbf16>, vector<4x384xbf16>, vector<8x384xf32> -> vector<8x384xf32>
    %21 = arith.addf %17, %20 : vector<8x384xf32>
    %c0_19 = arith.constant 0 : index
    %c0_20 = arith.constant 0 : index
    %c2 = arith.constant 2 : index
    %22 = vector.load %arg1[%c0_19, %c0_20, %c2] : memref<1x4x512xbf16, #tpu.memory_space<vmem>>, vector<1x4x384xbf16>
    %23 = vector.shape_cast %22 : vector<1x4x384xbf16> to vector<4x384xbf16>
    %cst_21 = arith.constant dense<0.000000e+00> : vector<8x384xf32>
    %24 = tpu.matmul %2, %23, %cst_21 {dimension_numbers = #tpu.dot_dimension_numbers<[1], [0], [0], [1], [0, 0, 1, 1], [], []>} : vector<8x4xbf16>, vector<4x384xbf16>, vector<8x384xf32> -> vector<8x384xf32>
    %25 = arith.addf %21, %24 : vector<8x384xf32>
    %c0_22 = arith.constant 0 : index
    %c0_23 = arith.constant 0 : index
    %c18 = arith.constant 18 : index
    %26 = vector.load %arg1[%c0_22, %c0_23, %c18] : memref<1x4x512xbf16, #tpu.memory_space<vmem>>, vector<1x4x384xbf16>
    %27 = vector.shape_cast %26 : vector<1x4x384xbf16> to vector<4x384xbf16>
    %cst_24 = arith.constant dense<0.000000e+00> : vector<8x384xf32>
    %28 = tpu.matmul %3, %27, %cst_24 {dimension_numbers = #tpu.dot_dimension_numbers<[1], [0], [0], [1], [0, 0, 1, 1], [], []>} : vector<8x4xbf16>, vector<4x384xbf16>, vector<8x384xf32> -> vector<8x384xf32>
    %29 = arith.addf %25, %28 : vector<8x384xf32>
    %c0_25 = arith.constant 0 : index
    %c0_26 = arith.constant 0 : index
    %c19 = arith.constant 19 : index
    %30 = vector.load %arg1[%c0_25, %c0_26, %c19] : memref<1x4x512xbf16, #tpu.memory_space<vmem>>, vector<1x4x384xbf16>
    %31 = vector.shape_cast %30 : vector<1x4x384xbf16> to vector<4x384xbf16>
    %cst_27 = arith.constant dense<0.000000e+00> : vector<8x384xf32>
    %32 = tpu.matmul %4, %31, %cst_27 {dimension_numbers = #tpu.dot_dimension_numbers<[1], [0], [0], [1], [0, 0, 1, 1], [], []>} : vector<8x4xbf16>, vector<4x384xbf16>, vector<8x384xf32> -> vector<8x384xf32>
    %33 = arith.addf %29, %32 : vector<8x384xf32>
    %c0_28 = arith.constant 0 : index
    %c0_29 = arith.constant 0 : index
    %c20_30 = arith.constant 20 : index
    %34 = vector.load %arg1[%c0_28, %c0_29, %c20_30] : memref<1x4x512xbf16, #tpu.memory_space<vmem>>, vector<1x4x384xbf16>
    %35 = vector.shape_cast %34 : vector<1x4x384xbf16> to vector<4x384xbf16>
    %cst_31 = arith.constant dense<0.000000e+00> : vector<8x384xf32>
    %36 = tpu.matmul %5, %35, %cst_31 {dimension_numbers = #tpu.dot_dimension_numbers<[1], [0], [0], [1], [0, 0, 1, 1], [], []>} : vector<8x4xbf16>, vector<4x384xbf16>, vector<8x384xf32> -> vector<8x384xf32>
    %37 = arith.addf %33, %36 : vector<8x384xf32>
    %c0_32 = arith.constant 0 : index
    %c0_33 = arith.constant 0 : index
    %c36 = arith.constant 36 : index
    %38 = vector.load %arg1[%c0_32, %c0_33, %c36] : memref<1x4x512xbf16, #tpu.memory_space<vmem>>, vector<1x4x384xbf16>
    %39 = vector.shape_cast %38 : vector<1x4x384xbf16> to vector<4x384xbf16>
    %cst_34 = arith.constant dense<0.000000e+00> : vector<8x384xf32>
    %40 = tpu.matmul %6, %39, %cst_34 {dimension_numbers = #tpu.dot_dimension_numbers<[1], [0], [0], [1], [0, 0, 1, 1], [], []>} : vector<8x4xbf16>, vector<4x384xbf16>, vector<8x384xf32> -> vector<8x384xf32>
    %41 = arith.addf %37, %40 : vector<8x384xf32>
    %c0_35 = arith.constant 0 : index
    %c0_36 = arith.constant 0 : index
    %c37 = arith.constant 37 : index
    %42 = vector.load %arg1[%c0_35, %c0_36, %c37] : memref<1x4x512xbf16, #tpu.memory_space<vmem>>, vector<1x4x384xbf16>
    %43 = vector.shape_cast %42 : vector<1x4x384xbf16> to vector<4x384xbf16>
    %cst_37 = arith.constant dense<0.000000e+00> : vector<8x384xf32>
    %44 = tpu.matmul %7, %43, %cst_37 {dimension_numbers = #tpu.dot_dimension_numbers<[1], [0], [0], [1], [0, 0, 1, 1], [], []>} : vector<8x4xbf16>, vector<4x384xbf16>, vector<8x384xf32> -> vector<8x384xf32>
    %45 = arith.addf %41, %44 : vector<8x384xf32>
    %c0_38 = arith.constant 0 : index
    %c0_39 = arith.constant 0 : index
    %c38 = arith.constant 38 : index
    %46 = vector.load %arg1[%c0_38, %c0_39, %c38] : memref<1x4x512xbf16, #tpu.memory_space<vmem>>, vector<1x4x384xbf16>
    %47 = vector.shape_cast %46 : vector<1x4x384xbf16> to vector<4x384xbf16>
    %cst_40 = arith.constant dense<0.000000e+00> : vector<8x384xf32>
    %48 = tpu.matmul %8, %47, %cst_40 {dimension_numbers = #tpu.dot_dimension_numbers<[1], [0], [0], [1], [0, 0, 1, 1], [], []>} : vector<8x4xbf16>, vector<4x384xbf16>, vector<8x384xf32> -> vector<8x384xf32>
    %49 = arith.addf %45, %48 : vector<8x384xf32>
    %50 = arith.mulf %49, %11 : vector<8x384xf32>
    %51 = arith.addf %50, %14 : vector<8x384xf32>
    %cst_41 = arith.constant 0.000000e+00 : f32
    %52 = vector.broadcast %cst_41 : f32 to vector<8x384xf32>
    %53 = arith.maximumf %51, %52 : vector<8x384xf32>
    %c0_42 = arith.constant 0 : index
    %c0_43 = arith.constant 0 : index
    %c0_44 = arith.constant 0 : index
    %54 = vector.load %arg5[%c0_42, %c0_43, %c0_44] : memref<1x8x384xf32, #tpu.memory_space<vmem>>, vector<1x8x384xf32>
    %55 = vector.shape_cast %54 : vector<1x8x384xf32> to vector<8x384xf32>
    %56 = vector.shape_cast %53 : vector<8x384xf32> to vector<1x8x384xf32>
    tpu.vector_store %arg5[%c0_42, %c0_43, %c0_44], %56 {strides = array<i32>} : memref<1x8x384xf32, #tpu.memory_space<vmem>>, vector<1x8x384xf32>,
    return
  }
  func.func @transform_0(%arg0: i32) -> (i32, i32, i32) {
    %c0_i32 = arith.constant 0 : i32
    %c0_i32_0 = arith.constant 0 : i32
    %c0_i32_1 = arith.constant 0 : i32
    return %arg0, %c0_i32, %c0_i32_0 : i32, i32, i32
  }
  func.func @transform_1(%arg0: i32) -> (i32, i32) {
    %c0_i32 = arith.constant 0 : i32
    %c0_i32_0 = arith.constant 0 : i32
    %c0_i32_1 = arith.constant 0 : i32
    return %c0_i32, %c0_i32_0 : i32, i32
  }
  func.func @transform_2(%arg0: i32) -> (i32, i32) {
    %c0_i32 = arith.constant 0 : i32
    %c0_i32_0 = arith.constant 0 : i32
    %c0_i32_1 = arith.constant 0 : i32
    return %c0_i32, %c0_i32_0 : i32, i32
  }
  func.func @transform_3(%arg0: i32) -> (i32, i32) {
    %c0_i32 = arith.constant 0 : i32
    %c0_i32_0 = arith.constant 0 : i32
    %c0_i32_1 = arith.constant 0 : i32
    return %c0_i32, %c0_i32_0 : i32, i32
  }
  func.func @transform_4(%arg0: i32) -> (i32, i32, i32) {
    %c0_i32 = arith.constant 0 : i32
    %c0_i32_0 = arith.constant 0 : i32
    %c0_i32_1 = arith.constant 0 : i32
    return %arg0, %c0_i32, %c0_i32_0 : i32, i32, i32
  }
}

</mosaic_0001>

<llo_original>
// kernel: tpu_custom_call.1
$region0: #{tpu_custom_call.1}
  #allocation0 [shape = 'u32[]', space=smem, size = 0x4, offset = 0x4, fixed_abs, tag = 'smem constant byte address 0x4 - core index']
  #allocation1 [shape = 'u32[144,128]{1,0:T(1,128)}', space=vmem, size = 0x12000, scoped, tag = 'internal scratch']
  %s0 = inlined_call_operand.vmem [shape: bf16[2,4,512], index: 0, kind: input, shape index: {}]
  %s1 = inlined_call_operand.vmem [shape: bf16[8,36], index: 1, kind: input, shape index: {}]
  %s2 = inlined_call_operand.vmem [shape: f32[8,1], index: 2, kind: input, shape index: {}]
  %s3 = inlined_call_operand.vmem [shape: f32[8,1], index: 3, kind: input, shape index: {}]
  %s4 = inlined_call_operand.hbm [shape: f32[2,8,384], index: 4, kind: output, shape index: {}]
  %s5 = sld [smem:[#allocation0]]
  $region49: #{tpu_custom_call.1} parent=0
    _
  %s7 = ssub.s32 1, %s5
  %s8 = scalar_select 0, %s7, %s5
  $region1: #{tpu_custom_call.1} parent=0
    #allocation2 [shape = 'u8[24576]{0}', space=vmem, size = 0x6000, scoped, tag = 'output window, operand 0']
    #allocation3 [shape = 's32[2]{0}', space=sflag, size = 0x8, scoped, tag = 'scoped memory for tpu_custom_call.1']
    %9 = vsyncpa [#allocation3], 0
    %s10 = scalar_lea.sflag [#allocation3], 1
    %11 = vsyncpa %s10, 0
    loop: start=0, step=1, limit=4
    $region2: #{tpu_custom_call.1} parent=1 // loop_pre_header
      _
    $region3: #{tpu_custom_call.1} parent=1 // loop_header
      %s13 = sphi 0, %s17
      %p14 = scmp.ge.s32.totalorder %s13, 4
      %s23 = sphi 0, %s25
      %s26 = sphi 0, %s23
      %s27 = sphi 0, %s26
      %s43 = sphi 0, %s27
      %s47 = sphi 0, %s47
      %s49 = sphi 0, %s47
      %s50 = sphi 0, %s49
      %s64 = sphi 0, %s50
      %s68 = sphi 0, %s68
      %s70 = sphi 0, %s68
      %s71 = sphi 0, %s70
      %s85 = sphi 0, %s71
      %s89 = sphi 0, %s89
      %s91 = sphi 0, %s89
      %s92 = sphi 0, %s91
      %s106 = sphi 0, %s92
      %s112 = sphi 0, %s114
      %s115 = sphi 0, %s112
      %s116 = sphi 0, %s115
      %s132 = sphi 0, %s116
    $region4: #{tpu_custom_call.1} parent=1 // loop_header_branch
      %16 = sbr.rel (%p14) target = $region8
    $region5: #{tpu_custom_call.1} parent=1 // loop_body
      %s18 = ssub.s32 %s13, 1
      %s19 = ssub.s32 %s13, 2
      %s20 = sadd.s32 %s13, 1
      %s21 = ssub.s32 %s13, %s20
      %p22 = scmp.eq.s32.totalorder %s21, 0
      %s24 = sadd.s32 %s23, 1
      %s25 = scalar_select %p22, %s23, %s24
      %p28 = pneg %p22
      %p29 = scmp.eq.s32.totalorder %s13, 1
      %p30 = por %p28, %p29
      %p31 = scmp.ne.s32.totalorder %s23, %s26
      %p32 = scmp.eq.s32.totalorder %s13, 0
      %p33 = por %p31, %p32
      %p34 = scmp.ne.s32.totalorder %s23, %s26
      %p35 = scmp.eq.s32.totalorder %s18, 1
      %p36 = por %p34, %p35
      %p37 = scmp.ne.s32.totalorder %s26, %s27
      %p38 = scmp.eq.s32.totalorder %s18, 0
      %p39 = por %p37, %p38
      %p40 = scmp.ne.s32.totalorder %s26, %s27
      %p41 = scmp.eq.s32.totalorder %s19, 1
      %p42 = por %p40, %p41
      %p44 = scmp.ne.s32.totalorder %s27, %s43
      %p45 = scmp.eq.s32.totalorder %s19, 0
      %p46 = por %p44, %p45
      %s48 = sadd.s32 %s47, 1
      %p51 = scmp.eq.s32.totalorder %s13, 1
      %p52 = scmp.ne.s32.totalorder %s47, %s49
      %p53 = scmp.eq.s32.totalorder %s13, 0
      %p54 = por %p52, %p53
      %p55 = scmp.ne.s32.totalorder %s47, %s49
      %p56 = scmp.eq.s32.totalorder %s18, 1
      %p57 = por %p55, %p56
      %p58 = scmp.ne.s32.totalorder %s49, %s50
      %p59 = scmp.eq.s32.totalorder %s18, 0
      %p60 = por %p58, %p59
      %p61 = scmp.ne.s32.totalorder %s49, %s50
      %p62 = scmp.eq.s32.totalorder %s19, 1
      %p63 = por %p61, %p62
      %p65 = scmp.ne.s32.totalorder %s50, %s64
      %p66 = scmp.eq.s32.totalorder %s19, 0
      %p67 = por %p65, %p66
      %s69 = sadd.s32 %s68, 1
      %p72 = scmp.eq.s32.totalorder %s13, 1
      %p73 = scmp.ne.s32.totalorder %s68, %s70
      %p74 = scmp.eq.s32.totalorder %s13, 0
      %p75 = por %p73, %p74
      %p76 = scmp.ne.s32.totalorder %s68, %s70
      %p77 = scmp.eq.s32.totalorder %s18, 1
      %p78 = por %p76, %p77
      %p79 = scmp.ne.s32.totalorder %s70, %s71
      %p80 = scmp.eq.s32.totalorder %s18, 0
      %p81 = por %p79, %p80
      %p82 = scmp.ne.s32.totalorder %s70, %s71
      %p83 = scmp.eq.s32.totalorder %s19, 1
      %p84 = por %p82, %p83
      %p86 = scmp.ne.s32.totalorder %s71, %s85
      %p87 = scmp.eq.s32.totalorder %s19, 0
      %p88 = por %p86, %p87
      %s90 = sadd.s32 %s89, 1
      %p93 = scmp.eq.s32.totalorder %s13, 1
      %p94 = scmp.ne.s32.totalorder %s89, %s91
      %p95 = scmp.eq.s32.totalorder %s13, 0
      %p96 = por %p94, %p95
      %p97 = scmp.ne.s32.totalorder %s89, %s91
      %p98 = scmp.eq.s32.totalorder %s18, 1
      %p99 = por %p97, %p98
      %p100 = scmp.ne.s32.totalorder %s91, %s92
      %p101 = scmp.eq.s32.totalorder %s18, 0
      %p102 = por %p100, %p101
      %p103 = scmp.ne.s32.totalorder %s91, %s92
      %p104 = scmp.eq.s32.totalorder %s19, 1
      %p105 = por %p103, %p104
      %p107 = scmp.ne.s32.totalorder %s92, %s106
      %p108 = scmp.eq.s32.totalorder %s19, 0
      %p109 = por %p107, %p108
      %s110 = ssub.s32 %s13, %s20
      %p111 = scmp.eq.s32.totalorder %s110, 0
      %s113 = sadd.s32 %s112, 1
      %s114 = scalar_select %p111, %s112, %s113
      %p117 = pneg %p111
      %p118 = scmp.eq.s32.totalorder %s13, 1
      %p119 = por %p117, %p118
      %p120 = scmp.ne.s32.totalorder %s112, %s115
      %p121 = scmp.eq.s32.totalorder %s13, 0
      %p122 = por %p120, %p121
      %p123 = scmp.ne.s32.totalorder %s112, %s115
      %p124 = scmp.eq.s32.totalorder %s18, 1
      %p125 = por %p123, %p124
      %p126 = scmp.ne.s32.totalorder %s115, %s116
      %p127 = scmp.eq.s32.totalorder %s18, 0
      %p128 = por %p126, %p127
      %p129 = scmp.ne.s32.totalorder %s115, %s116
      %p130 = scmp.eq.s32.totalorder %s19, 1
      %p131 = por %p129, %p130
      %p133 = scmp.ne.s32.totalorder %s116, %s132
      %p134 = scmp.eq.s32.totalorder %s19, 0
      %p135 = por %p133, %p134
      %p136 = scmp.le.s32.totalorder 1, %s13
      %p137 = scmp.lt.s32.totalorder %s13, 3
      %p138 = pnand %p136, %p137
      %p139 = pneg %p138
      // Predicated region
      $region9: #{tpu_custom_call.1} parent=5 // pred_check
        _
      $region10: #{tpu_custom_call.1} parent=5 // pred_check_branch
        %141 = sbr.rel (%p138) target = $region12
      $region11: #{tpu_custom_call.1} parent=5 // pred_region
        %s142 = ssub.s32 %s13, 1
        // Predicated region
        $region13: #{tpu_custom_call.1} parent=11 // pred_check
          %p143 = pneg %p60
        $region14: #{tpu_custom_call.1} parent=11 // pred_check_branch
          %145 = sbr.rel (%p143) target = $region16
        $region15: #{tpu_custom_call.1} parent=11 // pred_region
          _
        $region16: #{tpu_custom_call.1} parent=11 // pred_fallthru
          _
        // Predicated region
        $region17: #{tpu_custom_call.1} parent=11 // pred_check
          %p146 = pneg %p81
        $region18: #{tpu_custom_call.1} parent=11 // pred_check_branch
          %148 = sbr.rel (%p146) target = $region20
        $region19: #{tpu_custom_call.1} parent=11 // pred_region
          _
        $region20: #{tpu_custom_call.1} parent=11 // pred_fallthru
          _
        // Predicated region
        $region21: #{tpu_custom_call.1} parent=11 // pred_check
          %p149 = pneg %p102
        $region22: #{tpu_custom_call.1} parent=11 // pred_check_branch
          %151 = sbr.rel (%p149) target = $region24
        $region23: #{tpu_custom_call.1} parent=11 // pred_region
          _
        $region24: #{tpu_custom_call.1} parent=11 // pred_fallthru
          _
      $region12: #{tpu_custom_call.1} parent=5 // pred_fallthru
        _
      %p152 = scmp.lt.s32.totalorder %s13, 2
      // Predicated region
      $region25: #{tpu_custom_call.1} parent=5 // pred_check
        %p153 = pneg %p152
      $region26: #{tpu_custom_call.1} parent=5 // pred_check_branch
        %155 = sbr.rel (%p153) target = $region28
      $region27: #{tpu_custom_call.1} parent=5 // pred_region
        // Predicated region
        $region29: #{tpu_custom_call.1} parent=27 // pred_check
          %p156 = pneg %p33
        $region30: #{tpu_custom_call.1} parent=27 // pred_check_branch
          %158 = sbr.rel (%p156) target = $region32
        $region31: #{tpu_custom_call.1} parent=27 // pred_region
          %p159 = scmp.lt.s32.totalorder %s13, 1
          %s160 = scalar_select %p159, %s13, 1
          %s161 = smul.addr %s160, 4
          %s162 = smul.addr %s161, 2
          %s163 = scalar_lea.vmem %s0, %s162
        $region32: #{tpu_custom_call.1} parent=27 // pred_fallthru
          _
      $region28: #{tpu_custom_call.1} parent=5 // pred_fallthru
        _
      %p164 = scmp.le.s32.totalorder 1, %s13
      %p165 = scmp.lt.s32.totalorder %s13, 3
      %p166 = pnand %p164, %p165
      %p167 = pneg %p166
      // Predicated region
      $region33: #{tpu_custom_call.1} parent=5 // pred_check
        _
      $region34: #{tpu_custom_call.1} parent=5 // pred_check_branch
        %169 = sbr.rel (%p166) target = $region36
      $region35: #{tpu_custom_call.1} parent=5 // pred_region
        %s170 = ssub.s32 %s13, 1
        %p171 = scmp.lt.s32.totalorder %s18, 1
        %s172 = scalar_select %p171, %s18, 1
        %s173 = smul.addr %s172, 4
        %s174 = smul.addr %s173, 2
        %s175 = scalar_lea.vmem %s0, %s174
        %p176 = pneg %p39
        %p177 = pneg %p36
        %p178 = pneg %p60
        %p179 = pneg %p57
        %p180 = pneg %p81
        %p181 = pneg %p78
        %p182 = pneg %p102
        %p183 = pneg %p99
        %p184 = pneg %p128
        %p185 = pneg %p125
        %s186 = sand.u32 %s115, 1
        %s187 = scalar_lea.sflag [#allocation3], %s186
        %s188 = sand.u32 %s115, 1
        %s189 = smul.addr %s188, 24
        %s190 = scalar_lea.vmem [#allocation2], %s189
        %p191 = scmp.lt.s32.totalorder %s18, 1
        %s192 = scalar_select %p191, %s18, 1
        %s193 = smul.addr %s192, 4
        %s194 = smul.addr %s193, 2
        %s195 = scalar_lea.vmem %s0, %s194
        %v197 = vld [vmem:[%s1] sm:$0xf]
        %v198 = vld [vmem:[%s2] sm:$0xff]
        %200 = vset.pattern.permute.xlu0 0
        %201 = vperm.xlu0 %200, %v198
        %v202 = vpop.permute.xlu0 %201
        %v204 = vld [vmem:[%s3] sm:$0xff]
        %206 = vset.pattern.permute.xlu0 0
        %207 = vperm.xlu0 %206, %v204
        %v208 = vpop.permute.xlu0 %207
        %v210 = vld [vmem:[%s195] sm:$0x3f]
        %v211 = vld [vmem:[%s195] sm:$0xff]
        %v213 = vunpack.c.l.b16 %v197
        %v214 = vpack.c.b16 %v213, %v213
        %215 = vrot.lane.b32.xlu0 %v214, 124
        %v216 = vpop.permute.xlu0 %215
        %v218 = vcombine.high %v211, %v211
        %v220 = vunpack.c.l.s4 1983009808
        %v221 = vunpack.c.0.s8 %v220
        %v222 = vlaneseq
        %v223 = vshrl.u32 %v222, 7
        %v224 = vsub.s32 %v221, %v223
        %v225 = vrot.slane %v211, %v224
        %v227 = vunpack.c.l.s4 1983009808
        %v228 = vunpack.c.0.s8 %v227
        %v229 = vlaneseq
        %v230 = vshrl.u32 %v229, 7
        %v231 = vsub.s32 %v228, %v230
        %v232 = vrot.slane %v218, %v231
        %v233 = vcombine.high %v225, %v225
        %v234 = vcombine.high %v232, %v232
        %235 = vrot.lane.b32.xlu0 %v225, 127
        %v236 = vpop.permute.xlu0 %235
        %237 = vrot.lane.b32.xlu0 %v233, 127
        %v238 = vpop.permute.xlu0 %237
        %239 = vrot.lane.b32.xlu0 %v232, 127
        %v240 = vpop.permute.xlu0 %239
        %241 = vrot.lane.b32.xlu0 %v234, 127
        %v242 = vpop.permute.xlu0 %241
        %vm243 = vcmask 1039360
        %v244 = vsel %vm243, %v236, %v238
        %v245 = vsel %vm243, %v238, %v240
        %v246 = vsel %vm243, %v240, %v242
        %vm247 = vcmask 31744
        %v249 = vsel %vm247, %v216, 0
        %vm251 = vcmask 1041408
        %v253 = vsel %vm251, %v244, 0
        %v256 = vsel %vm251, %v245, 0
        %v259 = vsel %vm251, %v246, 0
        %261 = vmatprep.subr.bf16.mxu0 %v256
        %262 = vmatpush1.bf16.msra.mxu0 %v253
        %263 = vmatprep.subr.bf16.mxu0 0
        %264 = vmatpush1.bf16.msra.mxu0 0
        %265 = vmatprep.subr.bf16.mxu0 0
        %266 = vmatpush1.bf16.msra.mxu0 0
        %267 = vmatprep.subr.bf16.mxu0 0
        %268 = vmatpush1.bf16.msra.mxu0 0
        %269 = vmatprep.subr.bf16.mxu0 0
        %270 = vmatpush1.bf16.msra.mxu0 0
        %271 = vmatprep.subr.bf16.mxu0 0
        %272 = vmatpush1.bf16.msra.mxu0 0
        %273 = vmatprep.subr.bf16.mxu0 0
        %274 = vmatpush1.bf16.msra.mxu0 0
        %275 = vmatprep.subr.bf16.mxu0 0
        %276 = vmatpush1.bf16.msra.mxu0 0
        %277 = vmatprep.subr.bf16.mxu0 0
        %278 = vmatpush1.bf16.msra.mxu0 0
        %279 = vmatprep.subr.bf16.mxu0 0
        %280 = vmatpush1.bf16.msra.mxu0 0
        %281 = vmatprep.subr.bf16.mxu0 0
        %282 = vmatpush1.bf16.msra.mxu0 0
        %283 = vmatprep.subr.bf16.mxu0 0
        %284 = vmatpush1.bf16.msra.mxu0 0
        %285 = vmatprep.subr.bf16.mxu0 0
        %286 = vmatpush1.bf16.msra.mxu0 0
        %287 = vmatprep.subr.bf16.mxu0 0
        %288 = vmatpush1.bf16.msra.mxu0 0
        %289 = vmatprep.subr.bf16.mxu0 0
        %290 = vmatpush1.bf16.msra.mxu0 0
        %291 = vmatprep.subr.bf16.mxu0 0
        %292 = vmatpush1.bf16.msra.mxu0 0
        %293 = vmatprep.mubr.bf16.mxu0 0
        %294 = vmatmul.mubr.bf16.gmra.mrb[0].mxu0 %v249
        %v295 = vpop.f32.mrb[0].mxu0
        %v296 = vadd.f32 0.0, %v295
        %v297 = vpop.f32.mrb[0].mxu0
        %v298 = vadd.f32 0.0, %v297
        %v299 = vpop.f32.mrb[0].mxu0
        %v300 = vpop.f32.mrb[0].mxu0
        %301 = vdwg.mxu0
        %302 = vmatprep.subr.bf16.mxu0 0
        %303 = vmatpush1.bf16.msra.mxu0 %v259
        %304 = vmatprep.subr.bf16.mxu0 0
        %305 = vmatpush1.bf16.msra.mxu0 0
        %306 = vmatprep.subr.bf16.mxu0 0
        %307 = vmatpush1.bf16.msra.mxu0 0
        %308 = vmatprep.subr.bf16.mxu0 0
        %309 = vmatpush1.bf16.msra.mxu0 0
        %310 = vmatprep.subr.bf16.mxu0 0
        %311 = vmatpush1.bf16.msra.mxu0 0
        %312 = vmatprep.subr.bf16.mxu0 0
        %313 = vmatpush1.bf16.msra.mxu0 0
        %314 = vmatprep.subr.bf16.mxu0 0
        %315 = vmatpush1.bf16.msra.mxu0 0
        %316 = vmatprep.subr.bf16.mxu0 0
        %317 = vmatpush1.bf16.msra.mxu0 0
        %318 = vmatprep.subr.bf16.mxu0 0
        %319 = vmatpush1.bf16.msra.mxu0 0
        %320 = vmatprep.subr.bf16.mxu0 0
        %321 = vmatpush1.bf16.msra.mxu0 0
        %322 = vmatprep.subr.bf16.mxu0 0
        %323 = vmatpush1.bf16.msra.mxu0 0
        %324 = vmatprep.subr.bf16.mxu0 0
        %325 = vmatpush1.bf16.msra.mxu0 0
        %326 = vmatprep.subr.bf16.mxu0 0
        %327 = vmatpush1.bf16.msra.mxu0 0
        %328 = vmatprep.subr.bf16.mxu0 0
        %329 = vmatpush1.bf16.msra.mxu0 0
        %330 = vmatprep.subr.bf16.mxu0 0
        %331 = vmatpush1.bf16.msra.mxu0 0
        %332 = vmatprep.subr.bf16.mxu0 0
        %333 = vmatpush1.bf16.msra.mxu0 0
        %334 = vmatprep.mubr.bf16.mxu0 0
        %335 = vmatmul.mubr.bf16.gmra.mrb[0].mxu0 %v249
        %v336 = vpop.f32.mrb[0].mxu0
        %v337 = vadd.f32 0.0, %v336
        %v338 = vpop.f32.mrb[0].mxu0
        %v339 = vpop.f32.mrb[0].mxu0
        %v340 = vpop.f32.mrb[0].mxu0
        %341 = vdwg.mxu0
        %v343 = vcombine.high %v210, %v210
        %v345 = vunpack.c.l.s4 1983009808
        %v346 = vunpack.c.0.s8 %v345
        %v347 = vlaneseq
        %v348 = vshrl.u32 %v347, 7
        %v349 = vsub.s32 %v346, %v348
        %v350 = vrot.slane %v210, %v349
        %v352 = vunpack.c.l.s4 1983009808
        %v353 = vunpack.c.0.s8 %v352
        %v354 = vlaneseq
        %v355 = vshrl.u32 %v354, 7
        %v356 = vsub.s32 %v353, %v355
        %v357 = vrot.slane %v343, %v356
        %v358 = vcombine.high %v350, %v350
        %v360 = vsel %vm247, %v197, 0
        %v363 = vsel %vm251, %v350, 0
        %v366 = vsel %vm251, %v358, 0
        %v369 = vsel %vm251, %v357, 0
        %371 = vmatprep.subr.bf16.mxu0 %v366
        %372 = vmatpush1.bf16.msra.mxu0 %v363
        %373 = vmatprep.subr.bf16.mxu0 0
        %374 = vmatpush1.bf16.msra.mxu0 0
        %375 = vmatprep.subr.bf16.mxu0 0
        %376 = vmatpush1.bf16.msra.mxu0 0
        %377 = vmatprep.subr.bf16.mxu0 0
        %378 = vmatpush1.bf16.msra.mxu0 0
        %379 = vmatprep.subr.bf16.mxu0 0
        %380 = vmatpush1.bf16.msra.mxu0 0
        %381 = vmatprep.subr.bf16.mxu0 0
        %382 = vmatpush1.bf16.msra.mxu0 0
        %383 = vmatprep.subr.bf16.mxu0 0
        %384 = vmatpush1.bf16.msra.mxu0 0
        %385 = vmatprep.subr.bf16.mxu0 0
        %386 = vmatpush1.bf16.msra.mxu0 0
        %387 = vmatprep.subr.bf16.mxu0 0
        %388 = vmatpush1.bf16.msra.mxu0 0
        %389 = vmatprep.subr.bf16.mxu0 0
        %390 = vmatpush1.bf16.msra.mxu0 0
        %391 = vmatprep.subr.bf16.mxu0 0
        %392 = vmatpush1.bf16.msra.mxu0 0
        %393 = vmatprep.subr.bf16.mxu0 0
        %394 = vmatpush1.bf16.msra.mxu0 0
        %395 = vmatprep.subr.bf16.mxu0 0
        %396 = vmatpush1.bf16.msra.mxu0 0
        %397 = vmatprep.subr.bf16.mxu0 0
        %398 = vmatpush1.bf16.msra.mxu0 0
        %399 = vmatprep.subr.bf16.mxu0 0
        %400 = vmatpush1.bf16.msra.mxu0 0
        %401 = vmatprep.subr.bf16.mxu0 0
        %402 = vmatpush1.bf16.msra.mxu0 0
        %403 = vmatprep.mubr.bf16.mxu0 0
        %404 = vmatmul.mubr.bf16.gmra.mrb[0].mxu0 %v360
        %v405 = vpop.f32.mrb[0].mxu0
        %v406 = vadd.f32 %v296, %v405
        %v407 = vpop.f32.mrb[0].mxu0
        %v408 = vadd.f32 %v298, %v407
        %v409 = vpop.f32.mrb[0].mxu0
        %v410 = vpop.f32.mrb[0].mxu0
        %411 = vdwg.mxu0
        %412 = vmatprep.subr.bf16.mxu0 0
        %413 = vmatpush1.bf16.msra.mxu0 %v369
        %414 = vmatprep.subr.bf16.mxu0 0
        %415 = vmatpush1.bf16.msra.mxu0 0
        %416 = vmatprep.subr.bf16.mxu0 0
        %417 = vmatpush1.bf16.msra.mxu0 0
        %418 = vmatprep.subr.bf16.mxu0 0
        %419 = vmatpush1.bf16.msra.mxu0 0
        %420 = vmatprep.subr.bf16.mxu0 0
        %421 = vmatpush1.bf16.msra.mxu0 0
        %422 = vmatprep.subr.bf16.mxu0 0
        %423 = vmatpush1.bf16.msra.mxu0 0
        %424 = vmatprep.subr.bf16.mxu0 0
        %425 = vmatpush1.bf16.msra.mxu0 0
        %426 = vmatprep.subr.bf16.mxu0 0
        %427 = vmatpush1.bf16.msra.mxu0 0
        %428 = vmatprep.subr.bf16.mxu0 0
        %429 = vmatpush1.bf16.msra.mxu0 0
        %430 = vmatprep.subr.bf16.mxu0 0
        %431 = vmatpush1.bf16.msra.mxu0 0
        %432 = vmatprep.subr.bf16.mxu0 0
        %433 = vmatpush1.bf16.msra.mxu0 0
        %434 = vmatprep.subr.bf16.mxu0 0
        %435 = vmatpush1.bf16.msra.mxu0 0
        %436 = vmatprep.subr.bf16.mxu0 0
        %437 = vmatpush1.bf16.msra.mxu0 0
        %438 = vmatprep.subr.bf16.mxu0 0
        %439 = vmatpush1.bf16.msra.mxu0 0
        %440 = vmatprep.subr.bf16.mxu0 0
        %441 = vmatpush1.bf16.msra.mxu0 0
        %442 = vmatprep.subr.bf16.mxu0 0
        %443 = vmatpush1.bf16.msra.mxu0 0
        %444 = vmatprep.mubr.bf16.mxu0 0
        %445 = vmatmul.mubr.bf16.gmra.mrb[0].mxu0 %v360
        %v446 = vpop.f32.mrb[0].mxu0
        %v447 = vadd.f32 %v337, %v446
        %v448 = vpop.f32.mrb[0].mxu0
        %v449 = vpop.f32.mrb[0].mxu0
        %v450 = vpop.f32.mrb[0].mxu0
        %451 = vdwg.mxu0
        %v452 = vld [vmem:[%s195] sm:$0xff]
        %453 = vrot.lane.b32.xlu0 %v214, 120
        %v454 = vpop.permute.xlu0 %453
        %v456 = vcombine.high %v452, %v452
        %v458 = vunpack.c.l.s4 1983009808
        %v459 = vunpack.c.0.s8 %v458
        %v460 = vlaneseq
        %v461 = vshrl.u32 %v460, 7
        %v462 = vsub.s32 %v459, %v461
        %v463 = vrot.slane %v452, %v462
        %v465 = vunpack.c.l.s4 1983009808
        %v466 = vunpack.c.0.s8 %v465
        %v467 = vlaneseq
        %v468 = vshrl.u32 %v467, 7
        %v469 = vsub.s32 %v466, %v468
        %v470 = vrot.slane %v456, %v469
        %v471 = vcombine.high %v463, %v463
        %v472 = vcombine.high %v470, %v470
        %473 = vrot.lane.b32.xlu0 %v463, 126
        %v474 = vpop.permute.xlu0 %473
        %475 = vrot.lane.b32.xlu0 %v471, 126
        %v476 = vpop.permute.xlu0 %475
        %477 = vrot.lane.b32.xlu0 %v470, 126
        %v478 = vpop.permute.xlu0 %477
        %479 = vrot.lane.b32.xlu0 %v472, 126
        %v480 = vpop.permute.xlu0 %479
        %vm481 = vcmask 1031168
        %v482 = vsel %vm481, %v474, %v476
        %v483 = vsel %vm481, %v476, %v478
        %v484 = vsel %vm481, %v478, %v480
        %v486 = vsel %vm247, %v454, 0
        %v489 = vsel %vm251, %v482, 0
        %v492 = vsel %vm251, %v483, 0
        %v495 = vsel %vm251, %v484, 0
        %497 = vmatprep.subr.bf16.mxu0 %v492
        %498 = vmatpush1.bf16.msra.mxu0 %v489
        %499 = vmatprep.subr.bf16.mxu0 0
        %500 = vmatpush1.bf16.msra.mxu0 0
        %501 = vmatprep.subr.bf16.mxu0 0
        %502 = vmatpush1.bf16.msra.mxu0 0
        %503 = vmatprep.subr.bf16.mxu0 0
        %504 = vmatpush1.bf16.msra.mxu0 0
        %505 = vmatprep.subr.bf16.mxu0 0
        %506 = vmatpush1.bf16.msra.mxu0 0
        %507 = vmatprep.subr.bf16.mxu0 0
        %508 = vmatpush1.bf16.msra.mxu0 0
        %509 = vmatprep.subr.bf16.mxu0 0
        %510 = vmatpush1.bf16.msra.mxu0 0
        %511 = vmatprep.subr.bf16.mxu0 0
        %512 = vmatpush1.bf16.msra.mxu0 0
        %513 = vmatprep.subr.bf16.mxu0 0
        %514 = vmatpush1.bf16.msra.mxu0 0
        %515 = vmatprep.subr.bf16.mxu0 0
        %516 = vmatpush1.bf16.msra.mxu0 0
        %517 = vmatprep.subr.bf16.mxu0 0
        %518 = vmatpush1.bf16.msra.mxu0 0
        %519 = vmatprep.subr.bf16.mxu0 0
        %520 = vmatpush1.bf16.msra.mxu0 0
        %521 = vmatprep.subr.bf16.mxu0 0
        %522 = vmatpush1.bf16.msra.mxu0 0
        %523 = vmatprep.subr.bf16.mxu0 0
        %524 = vmatpush1.bf16.msra.mxu0 0
        %525 = vmatprep.subr.bf16.mxu0 0
        %526 = vmatpush1.bf16.msra.mxu0 0
        %527 = vmatprep.subr.bf16.mxu0 0
        %528 = vmatpush1.bf16.msra.mxu0 0
        %529 = vmatprep.mubr.bf16.mxu0 0
        %530 = vmatmul.mubr.bf16.gmra.mrb[0].mxu0 %v486
        %v531 = vpop.f32.mrb[0].mxu0
        %v532 = vadd.f32 0.0, %v531
        %v533 = vpop.f32.mrb[0].mxu0
        %v534 = vadd.f32 0.0, %v533
        %v535 = vpop.f32.mrb[0].mxu0
        %v536 = vpop.f32.mrb[0].mxu0
        %537 = vdwg.mxu0
        %538 = vmatprep.subr.bf16.mxu0 0
        %539 = vmatpush1.bf16.msra.mxu0 %v495
        %540 = vmatprep.subr.bf16.mxu0 0
        %541 = vmatpush1.bf16.msra.mxu0 0
        %542 = vmatprep.subr.bf16.mxu0 0
        %543 = vmatpush1.bf16.msra.mxu0 0
        %544 = vmatprep.subr.bf16.mxu0 0
        %545 = vmatpush1.bf16.msra.mxu0 0
        %546 = vmatprep.subr.bf16.mxu0 0
        %547 = vmatpush1.bf16.msra.mxu0 0
        %548 = vmatprep.subr.bf16.mxu0 0
        %549 = vmatpush1.bf16.msra.mxu0 0
        %550 = vmatprep.subr.bf16.mxu0 0
        %551 = vmatpush1.bf16.msra.mxu0 0
        %552 = vmatprep.subr.bf16.mxu0 0
        %553 = vmatpush1.bf16.msra.mxu0 0
        %554 = vmatprep.subr.bf16.mxu0 0
        %555 = vmatpush1.bf16.msra.mxu0 0
        %556 = vmatprep.subr.bf16.mxu0 0
        %557 = vmatpush1.bf16.msra.mxu0 0
        %558 = vmatprep.subr.bf16.mxu0 0
        %559 = vmatpush1.bf16.msra.mxu0 0
        %560 = vmatprep.subr.bf16.mxu0 0
        %561 = vmatpush1.bf16.msra.mxu0 0
        %562 = vmatprep.subr.bf16.mxu0 0
        %563 = vmatpush1.bf16.msra.mxu0 0
        %564 = vmatprep.subr.bf16.mxu0 0
        %565 = vmatpush1.bf16.msra.mxu0 0
        %566 = vmatprep.subr.bf16.mxu0 0
        %567 = vmatpush1.bf16.msra.mxu0 0
        %568 = vmatprep.subr.bf16.mxu0 0
        %569 = vmatpush1.bf16.msra.mxu0 0
        %570 = vmatprep.mubr.bf16.mxu0 0
        %571 = vmatmul.mubr.bf16.gmra.mrb[0].mxu0 %v486
        %v572 = vpop.f32.mrb[0].mxu0
        %v573 = vadd.f32 0.0, %v572
        %v574 = vpop.f32.mrb[0].mxu0
        %v575 = vpop.f32.mrb[0].mxu0
        %v576 = vpop.f32.mrb[0].mxu0
        %577 = vdwg.mxu0
        %v578 = vadd.f32 %v406, %v532
        %v579 = vadd.f32 %v408, %v534
        %v580 = vadd.f32 %v447, %v573
        %v581 = vld [vmem:[%s195] sm:$0xff]
        %582 = vrot.lane.b32.xlu0 %v214, 116
        %v583 = vpop.permute.xlu0 %582
        %v585 = vcombine.high %v581, %v581
        %v587 = vunpack.c.l.s4 1983009808
        %v588 = vunpack.c.0.s8 %v587
        %v589 = vlaneseq
        %v590 = vshrl.u32 %v589, 7
        %v591 = vsub.s32 %v588, %v590
        %v592 = vrot.slane %v581, %v591
        %v594 = vunpack.c.l.s4 1983009808
        %v595 = vunpack.c.0.s8 %v594
        %v596 = vlaneseq
        %v597 = vshrl.u32 %v596, 7
        %v598 = vsub.s32 %v595, %v597
        %v599 = vrot.slane %v585, %v598
        %v600 = vcombine.high %v592, %v592
        %v601 = vcombine.high %v599, %v599
        %602 = vrot.lane.b32.xlu0 %v592, 110
        %v603 = vpop.permute.xlu0 %602
        %604 = vrot.lane.b32.xlu0 %v600, 110
        %v605 = vpop.permute.xlu0 %604
        %606 = vrot.lane.b32.xlu0 %v599, 110
        %v607 = vpop.permute.xlu0 %606
        %608 = vrot.lane.b32.xlu0 %v601, 110
        %v609 = vpop.permute.xlu0 %608
        %vm610 = vcmask 900096
        %v611 = vsel %vm610, %v603, %v605
        %v612 = vsel %vm610, %v605, %v607
        %v613 = vsel %vm610, %v607, %v609
        %v615 = vsel %vm247, %v583, 0
        %v618 = vsel %vm251, %v611, 0
        %v621 = vsel %vm251, %v612, 0
        %v624 = vsel %vm251, %v613, 0
        %626 = vmatprep.subr.bf16.mxu0 %v621
        %627 = vmatpush1.bf16.msra.mxu0 %v618
        %628 = vmatprep.subr.bf16.mxu0 0
        %629 = vmatpush1.bf16.msra.mxu0 0
        %630 = vmatprep.subr.bf16.mxu0 0
        %631 = vmatpush1.bf16.msra.mxu0 0
        %632 = vmatprep.subr.bf16.mxu0 0
        %633 = vmatpush1.bf16.msra.mxu0 0
        %634 = vmatprep.subr.bf16.mxu0 0
        %635 = vmatpush1.bf16.msra.mxu0 0
        %636 = vmatprep.subr.bf16.mxu0 0
        %637 = vmatpush1.bf16.msra.mxu0 0
        %638 = vmatprep.subr.bf16.mxu0 0
        %639 = vmatpush1.bf16.msra.mxu0 0
        %640 = vmatprep.subr.bf16.mxu0 0
        %641 = vmatpush1.bf16.msra.mxu0 0
        %642 = vmatprep.subr.bf16.mxu0 0
        %643 = vmatpush1.bf16.msra.mxu0 0
        %644 = vmatprep.subr.bf16.mxu0 0
        %645 = vmatpush1.bf16.msra.mxu0 0
        %646 = vmatprep.subr.bf16.mxu0 0
        %647 = vmatpush1.bf16.msra.mxu0 0
        %648 = vmatprep.subr.bf16.mxu0 0
        %649 = vmatpush1.bf16.msra.mxu0 0
        %650 = vmatprep.subr.bf16.mxu0 0
        %651 = vmatpush1.bf16.msra.mxu0 0
        %652 = vmatprep.subr.bf16.mxu0 0
        %653 = vmatpush1.bf16.msra.mxu0 0
        %654 = vmatprep.subr.bf16.mxu0 0
        %655 = vmatpush1.bf16.msra.mxu0 0
        %656 = vmatprep.subr.bf16.mxu0 0
        %657 = vmatpush1.bf16.msra.mxu0 0
        %658 = vmatprep.mubr.bf16.mxu0 0
        %659 = vmatmul.mubr.bf16.gmra.mrb[0].mxu0 %v615
        %v660 = vpop.f32.mrb[0].mxu0
        %v661 = vadd.f32 0.0, %v660
        %v662 = vpop.f32.mrb[0].mxu0
        %v663 = vadd.f32 0.0, %v662
        %v664 = vpop.f32.mrb[0].mxu0
        %v665 = vpop.f32.mrb[0].mxu0
        %666 = vdwg.mxu0
        %667 = vmatprep.subr.bf16.mxu0 0
        %668 = vmatpush1.bf16.msra.mxu0 %v624
        %669 = vmatprep.subr.bf16.mxu0 0
        %670 = vmatpush1.bf16.msra.mxu0 0
        %671 = vmatprep.subr.bf16.mxu0 0
        %672 = vmatpush1.bf16.msra.mxu0 0
        %673 = vmatprep.subr.bf16.mxu0 0
        %674 = vmatpush1.bf16.msra.mxu0 0
        %675 = vmatprep.subr.bf16.mxu0 0
        %676 = vmatpush1.bf16.msra.mxu0 0
        %677 = vmatprep.subr.bf16.mxu0 0
        %678 = vmatpush1.bf16.msra.mxu0 0
        %679 = vmatprep.subr.bf16.mxu0 0
        %680 = vmatpush1.bf16.msra.mxu0 0
        %681 = vmatprep.subr.bf16.mxu0 0
        %682 = vmatpush1.bf16.msra.mxu0 0
        %683 = vmatprep.subr.bf16.mxu0 0
        %684 = vmatpush1.bf16.msra.mxu0 0
        %685 = vmatprep.subr.bf16.mxu0 0
        %686 = vmatpush1.bf16.msra.mxu0 0
        %687 = vmatprep.subr.bf16.mxu0 0
        %688 = vmatpush1.bf16.msra.mxu0 0
        %689 = vmatprep.subr.bf16.mxu0 0
        %690 = vmatpush1.bf16.msra.mxu0 0
        %691 = vmatprep.subr.bf16.mxu0 0
        %692 = vmatpush1.bf16.msra.mxu0 0
        %693 = vmatprep.subr.bf16.mxu0 0
        %694 = vmatpush1.bf16.msra.mxu0 0
        %695 = vmatprep.subr.bf16.mxu0 0
        %696 = vmatpush1.bf16.msra.mxu0 0
        %697 = vmatprep.subr.bf16.mxu0 0
        %698 = vmatpush1.bf16.msra.mxu0 0
        %699 = vmatprep.mubr.bf16.mxu0 0
        %700 = vmatmul.mubr.bf16.gmra.mrb[0].mxu0 %v615
        %v701 = vpop.f32.mrb[0].mxu0
        %v702 = vadd.f32 0.0, %v701
        %v703 = vpop.f32.mrb[0].mxu0
        %v704 = vpop.f32.mrb[0].mxu0
        %v705 = vpop.f32.mrb[0].mxu0
        %706 = vdwg.mxu0
        %v707 = vadd.f32 %v578, %v661
        %v708 = vadd.f32 %v579, %v663
        %v709 = vadd.f32 %v580, %v702
        %v710 = vld [vmem:[%s195] sm:$0xff]
        %711 = vrot.lane.b32.xlu0 %v214, 112
        %v712 = vpop.permute.xlu0 %711
        %v714 = vcombine.high %v710, %v710
        %v716 = vunpack.c.l.s4 1983009808
        %v717 = vunpack.c.0.s8 %v716
        %v718 = vlaneseq
        %v719 = vshrl.u32 %v718, 7
        %v720 = vsub.s32 %v717, %v719
        %v721 = vrot.slane %v710, %v720
        %v723 = vunpack.c.l.s4 1983009808
        %v724 = vunpack.c.0.s8 %v723
        %v725 = vlaneseq
        %v726 = vshrl.u32 %v725, 7
        %v727 = vsub.s32 %v724, %v726
        %v728 = vrot.slane %v714, %v727
        %v729 = vcombine.high %v721, %v721
        %v730 = vcombine.high %v728, %v728
        %731 = vrot.lane.b32.xlu0 %v721, 109
        %v732 = vpop.permute.xlu0 %731
        %733 = vrot.lane.b32.xlu0 %v729, 109
        %v734 = vpop.permute.xlu0 %733
        %735 = vrot.lane.b32.xlu0 %v728, 109
        %v736 = vpop.permute.xlu0 %735
        %737 = vrot.lane.b32.xlu0 %v730, 109
        %v738 = vpop.permute.xlu0 %737
        %vm739 = vcmask 891904
        %v740 = vsel %vm739, %v732, %v734
        %v741 = vsel %vm739, %v734, %v736
        %v742 = vsel %vm739, %v736, %v738
        %v744 = vsel %vm247, %v712, 0
        %v747 = vsel %vm251, %v740, 0
        %v750 = vsel %vm251, %v741, 0
        %v753 = vsel %vm251, %v742, 0
        %755 = vmatprep.subr.bf16.mxu0 %v750
        %756 = vmatpush1.bf16.msra.mxu0 %v747
        %757 = vmatprep.subr.bf16.mxu0 0
        %758 = vmatpush1.bf16.msra.mxu0 0
        %759 = vmatprep.subr.bf16.mxu0 0
        %760 = vmatpush1.bf16.msra.mxu0 0
        %761 = vmatprep.subr.bf16.mxu0 0
        %762 = vmatpush1.bf16.msra.mxu0 0
        %763 = vmatprep.subr.bf16.mxu0 0
        %764 = vmatpush1.bf16.msra.mxu0 0
        %765 = vmatprep.subr.bf16.mxu0 0
        %766 = vmatpush1.bf16.msra.mxu0 0
        %767 = vmatprep.subr.bf16.mxu0 0
        %768 = vmatpush1.bf16.msra.mxu0 0
        %769 = vmatprep.subr.bf16.mxu0 0
        %770 = vmatpush1.bf16.msra.mxu0 0
        %771 = vmatprep.subr.bf16.mxu0 0
        %772 = vmatpush1.bf16.msra.mxu0 0
        %773 = vmatprep.subr.bf16.mxu0 0
        %774 = vmatpush1.bf16.msra.mxu0 0
        %775 = vmatprep.subr.bf16.mxu0 0
        %776 = vmatpush1.bf16.msra.mxu0 0
        %777 = vmatprep.subr.bf16.mxu0 0
        %778 = vmatpush1.bf16.msra.mxu0 0
        %779 = vmatprep.subr.bf16.mxu0 0
        %780 = vmatpush1.bf16.msra.mxu0 0
        %781 = vmatprep.subr.bf16.mxu0 0
        %782 = vmatpush1.bf16.msra.mxu0 0
        %783 = vmatprep.subr.bf16.mxu0 0
        %784 = vmatpush1.bf16.msra.mxu0 0
        %785 = vmatprep.subr.bf16.mxu0 0
        %786 = vmatpush1.bf16.msra.mxu0 0
        %787 = vmatprep.mubr.bf16.mxu0 0
        %788 = vmatmul.mubr.bf16.gmra.mrb[0].mxu0 %v744
        %v789 = vpop.f32.mrb[0].mxu0
        %v790 = vadd.f32 0.0, %v789
        %v791 = vpop.f32.mrb[0].mxu0
        %v792 = vadd.f32 0.0, %v791
        %v793 = vpop.f32.mrb[0].mxu0
        %v794 = vpop.f32.mrb[0].mxu0
        %795 = vdwg.mxu0
        %796 = vmatprep.subr.bf16.mxu0 0
        %797 = vmatpush1.bf16.msra.mxu0 %v753
        %798 = vmatprep.subr.bf16.mxu0 0
        %799 = vmatpush1.bf16.msra.mxu0 0
        %800 = vmatprep.subr.bf16.mxu0 0
        %801 = vmatpush1.bf16.msra.mxu0 0
        %802 = vmatprep.subr.bf16.mxu0 0
        %803 = vmatpush1.bf16.msra.mxu0 0
        %804 = vmatprep.subr.bf16.mxu0 0
        %805 = vmatpush1.bf16.msra.mxu0 0
        %806 = vmatprep.subr.bf16.mxu0 0
        %807 = vmatpush1.bf16.msra.mxu0 0
        %808 = vmatprep.subr.bf16.mxu0 0
        %809 = vmatpush1.bf16.msra.mxu0 0
        %810 = vmatprep.subr.bf16.mxu0 0
        %811 = vmatpush1.bf16.msra.mxu0 0
        %812 = vmatprep.subr.bf16.mxu0 0
        %813 = vmatpush1.bf16.msra.mxu0 0
        %814 = vmatprep.subr.bf16.mxu0 0
        %815 = vmatpush1.bf16.msra.mxu0 0
        %816 = vmatprep.subr.bf16.mxu0 0
        %817 = vmatpush1.bf16.msra.mxu0 0
        %818 = vmatprep.subr.bf16.mxu0 0
        %819 = vmatpush1.bf16.msra.mxu0 0
        %820 = vmatprep.subr.bf16.mxu0 0
        %821 = vmatpush1.bf16.msra.mxu0 0
        %822 = vmatprep.subr.bf16.mxu0 0
        %823 = vmatpush1.bf16.msra.mxu0 0
        %824 = vmatprep.subr.bf16.mxu0 0
        %825 = vmatpush1.bf16.msra.mxu0 0
        %826 = vmatprep.subr.bf16.mxu0 0
        %827 = vmatpush1.bf16.msra.mxu0 0
        %828 = vmatprep.mubr.bf16.mxu0 0
        %829 = vmatmul.mubr.bf16.gmra.mrb[0].mxu0 %v744
        %v830 = vpop.f32.mrb[0].mxu0
        %v831 = vadd.f32 0.0, %v830
        %v832 = vpop.f32.mrb[0].mxu0
        %v833 = vpop.f32.mrb[0].mxu0
        %v834 = vpop.f32.mrb[0].mxu0
        %835 = vdwg.mxu0
        %v836 = vadd.f32 %v707, %v790
        %v837 = vadd.f32 %v708, %v792
        %v838 = vadd.f32 %v709, %v831
        %v839 = vld [vmem:[%s195] sm:$0xff]
        %840 = vrot.lane.b32.xlu0 %v214, 108
        %v841 = vpop.permute.xlu0 %840
        %v843 = vcombine.high %v839, %v839
        %v845 = vunpack.c.l.s4 1983009808
        %v846 = vunpack.c.0.s8 %v845
        %v847 = vlaneseq
        %v848 = vshrl.u32 %v847, 7
        %v849 = vsub.s32 %v846, %v848
        %v850 = vrot.slane %v839, %v849
        %v852 = vunpack.c.l.s4 1983009808
        %v853 = vunpack.c.0.s8 %v852
        %v854 = vlaneseq
        %v855 = vshrl.u32 %v854, 7
        %v856 = vsub.s32 %v853, %v855
        %v857 = vrot.slane %v843, %v856
        %v858 = vcombine.high %v850, %v850
        %v859 = vcombine.high %v857, %v857
        %860 = vrot.lane.b32.xlu0 %v850, 108
        %v861 = vpop.permute.xlu0 %860
        %862 = vrot.lane.b32.xlu0 %v858, 108
        %v863 = vpop.permute.xlu0 %862
        %864 = vrot.lane.b32.xlu0 %v857, 108
        %v865 = vpop.permute.xlu0 %864
        %866 = vrot.lane.b32.xlu0 %v859, 108
        %v867 = vpop.permute.xlu0 %866
        %vm868 = vcmask 883712
        %v869 = vsel %vm868, %v861, %v863
        %v870 = vsel %vm868, %v863, %v865
        %v871 = vsel %vm868, %v865, %v867
        %v873 = vsel %vm247, %v841, 0
        %v876 = vsel %vm251, %v869, 0
        %v879 = vsel %vm251, %v870, 0
        %v882 = vsel %vm251, %v871, 0
        %884 = vmatprep.subr.bf16.mxu0 %v879
        %885 = vmatpush1.bf16.msra.mxu0 %v876
        %886 = vmatprep.subr.bf16.mxu0 0
        %887 = vmatpush1.bf16.msra.mxu0 0
        %888 = vmatprep.subr.bf16.mxu0 0
        %889 = vmatpush1.bf16.msra.mxu0 0
        %890 = vmatprep.subr.bf16.mxu0 0
        %891 = vmatpush1.bf16.msra.mxu0 0
        %892 = vmatprep.subr.bf16.mxu0 0
        %893 = vmatpush1.bf16.msra.mxu0 0
        %894 = vmatprep.subr.bf16.mxu0 0
        %895 = vmatpush1.bf16.msra.mxu0 0
        %896 = vmatprep.subr.bf16.mxu0 0
        %897 = vmatpush1.bf16.msra.mxu0 0
        %898 = vmatprep.subr.bf16.mxu0 0
        %899 = vmatpush1.bf16.msra.mxu0 0
        %900 = vmatprep.subr.bf16.mxu0 0
        %901 = vmatpush1.bf16.msra.mxu0 0
        %902 = vmatprep.subr.bf16.mxu0 0
        %903 = vmatpush1.bf16.msra.mxu0 0
        %904 = vmatprep.subr.bf16.mxu0 0
        %905 = vmatpush1.bf16.msra.mxu0 0
        %906 = vmatprep.subr.bf16.mxu0 0
        %907 = vmatpush1.bf16.msra.mxu0 0
        %908 = vmatprep.subr.bf16.mxu0 0
        %909 = vmatpush1.bf16.msra.mxu0 0
        %910 = vmatprep.subr.bf16.mxu0 0
        %911 = vmatpush1.bf16.msra.mxu0 0
        %912 = vmatprep.subr.bf16.mxu0 0
        %913 = vmatpush1.bf16.msra.mxu0 0
        %914 = vmatprep.subr.bf16.mxu0 0
        %915 = vmatpush1.bf16.msra.mxu0 0
        %916 = vmatprep.mubr.bf16.mxu0 0
        %917 = vmatmul.mubr.bf16.gmra.mrb[0].mxu0 %v873
        %v918 = vpop.f32.mrb[0].mxu0
        %v919 = vadd.f32 0.0, %v918
        %v920 = vpop.f32.mrb[0].mxu0
        %v921 = vadd.f32 0.0, %v920
        %v922 = vpop.f32.mrb[0].mxu0
        %v923 = vpop.f32.mrb[0].mxu0
        %924 = vdwg.mxu0
        %925 = vmatprep.subr.bf16.mxu0 0
        %926 = vmatpush1.bf16.msra.mxu0 %v882
        %927 = vmatprep.subr.bf16.mxu0 0
        %928 = vmatpush1.bf16.msra.mxu0 0
        %929 = vmatprep.subr.bf16.mxu0 0
        %930 = vmatpush1.bf16.msra.mxu0 0
        %931 = vmatprep.subr.bf16.mxu0 0
        %932 = vmatpush1.bf16.msra.mxu0 0
        %933 = vmatprep.subr.bf16.mxu0 0
        %934 = vmatpush1.bf16.msra.mxu0 0
        %935 = vmatprep.subr.bf16.mxu0 0
        %936 = vmatpush1.bf16.msra.mxu0 0
        %937 = vmatprep.subr.bf16.mxu0 0
        %938 = vmatpush1.bf16.msra.mxu0 0
        %939 = vmatprep.subr.bf16.mxu0 0
        %940 = vmatpush1.bf16.msra.mxu0 0
        %941 = vmatprep.subr.bf16.mxu0 0
        %942 = vmatpush1.bf16.msra.mxu0 0
        %943 = vmatprep.subr.bf16.mxu0 0
        %944 = vmatpush1.bf16.msra.mxu0 0
        %945 = vmatprep.subr.bf16.mxu0 0
        %946 = vmatpush1.bf16.msra.mxu0 0
        %947 = vmatprep.subr.bf16.mxu0 0
        %948 = vmatpush1.bf16.msra.mxu0 0
        %949 = vmatprep.subr.bf16.mxu0 0
        %950 = vmatpush1.bf16.msra.mxu0 0
        %951 = vmatprep.subr.bf16.mxu0 0
        %952 = vmatpush1.bf16.msra.mxu0 0
        %953 = vmatprep.subr.bf16.mxu0 0
        %954 = vmatpush1.bf16.msra.mxu0 0
        %955 = vmatprep.subr.bf16.mxu0 0
        %956 = vmatpush1.bf16.msra.mxu0 0
        %957 = vmatprep.mubr.bf16.mxu0 0
        %958 = vmatmul.mubr.bf16.gmra.mrb[0].mxu0 %v873
        %v959 = vpop.f32.mrb[0].mxu0
        %v960 = vadd.f32 0.0, %v959
        %v961 = vpop.f32.mrb[0].mxu0
        %v962 = vpop.f32.mrb[0].mxu0
        %v963 = vpop.f32.mrb[0].mxu0
        %964 = vdwg.mxu0
        %v965 = vadd.f32 %v836, %v919
        %v966 = vadd.f32 %v837, %v921
        %v967 = vadd.f32 %v838, %v960
        %v968 = vld [vmem:[%s195] sm:$0xff]
        %969 = vrot.lane.b32.xlu0 %v214, 104
        %v970 = vpop.permute.xlu0 %969
        %v972 = vcombine.high %v968, %v968
        %v974 = vunpack.c.l.s4 1983009808
        %v975 = vunpack.c.0.s8 %v974
        %v976 = vlaneseq
        %v977 = vshrl.u32 %v976, 7
        %v978 = vsub.s32 %v975, %v977
        %v979 = vrot.slane %v968, %v978
        %v981 = vunpack.c.l.s4 1983009808
        %v982 = vunpack.c.0.s8 %v981
        %v983 = vlaneseq
        %v984 = vshrl.u32 %v983, 7
        %v985 = vsub.s32 %v982, %v984
        %v986 = vrot.slane %v972, %v985
        %v987 = vcombine.high %v979, %v979
        %v988 = vcombine.high %v986, %v986
        %989 = vrot.lane.b32.xlu0 %v979, 92
        %v990 = vpop.permute.xlu0 %989
        %991 = vrot.lane.b32.xlu0 %v987, 92
        %v992 = vpop.permute.xlu0 %991
        %993 = vrot.lane.b32.xlu0 %v986, 92
        %v994 = vpop.permute.xlu0 %993
        %995 = vrot.lane.b32.xlu0 %v988, 92
        %v996 = vpop.permute.xlu0 %995
        %vm997 = vcmask 752640
        %v998 = vsel %vm997, %v990, %v992
        %v999 = vsel %vm997, %v992, %v994
        %v1000 = vsel %vm997, %v994, %v996
        %v1002 = vsel %vm247, %v970, 0
        %v1005 = vsel %vm251, %v998, 0
        %v1008 = vsel %vm251, %v999, 0
        %v1011 = vsel %vm251, %v1000, 0
        %1013 = vmatprep.subr.bf16.mxu0 %v1008
        %1014 = vmatpush1.bf16.msra.mxu0 %v1005
        %1015 = vmatprep.subr.bf16.mxu0 0
        %1016 = vmatpush1.bf16.msra.mxu0 0
        %1017 = vmatprep.subr.bf16.mxu0 0
        %1018 = vmatpush1.bf16.msra.mxu0 0
        %1019 = vmatprep.subr.bf16.mxu0 0
        %1020 = vmatpush1.bf16.msra.mxu0 0
        %1021 = vmatprep.subr.bf16.mxu0 0
        %1022 = vmatpush1.bf16.msra.mxu0 0
        %1023 = vmatprep.subr.bf16.mxu0 0
        %1024 = vmatpush1.bf16.msra.mxu0 0
        %1025 = vmatprep.subr.bf16.mxu0 0
        %1026 = vmatpush1.bf16.msra.mxu0 0
        %1027 = vmatprep.subr.bf16.mxu0 0
        %1028 = vmatpush1.bf16.msra.mxu0 0
        %1029 = vmatprep.subr.bf16.mxu0 0
        %1030 = vmatpush1.bf16.msra.mxu0 0
        %1031 = vmatprep.subr.bf16.mxu0 0
        %1032 = vmatpush1.bf16.msra.mxu0 0
        %1033 = vmatprep.subr.bf16.mxu0 0
        %1034 = vmatpush1.bf16.msra.mxu0 0
        %1035 = vmatprep.subr.bf16.mxu0 0
        %1036 = vmatpush1.bf16.msra.mxu0 0
        %1037 = vmatprep.subr.bf16.mxu0 0
        %1038 = vmatpush1.bf16.msra.mxu0 0
        %1039 = vmatprep.subr.bf16.mxu0 0
        %1040 = vmatpush1.bf16.msra.mxu0 0
        %1041 = vmatprep.subr.bf16.mxu0 0
        %1042 = vmatpush1.bf16.msra.mxu0 0
        %1043 = vmatprep.subr.bf16.mxu0 0
        %1044 = vmatpush1.bf16.msra.mxu0 0
        %1045 = vmatprep.mubr.bf16.mxu0 0
        %1046 = vmatmul.mubr.bf16.gmra.mrb[0].mxu0 %v1002
        %v1047 = vpop.f32.mrb[0].mxu0
        %v1048 = vadd.f32 0.0, %v1047
        %v1049 = vpop.f32.mrb[0].mxu0
        %v1050 = vadd.f32 0.0, %v1049
        %v1051 = vpop.f32.mrb[0].mxu0
        %v1052 = vpop.f32.mrb[0].mxu0
        %1053 = vdwg.mxu0
        %1054 = vmatprep.subr.bf16.mxu0 0
        %1055 = vmatpush1.bf16.msra.mxu0 %v1011
        %1056 = vmatprep.subr.bf16.mxu0 0
        %1057 = vmatpush1.bf16.msra.mxu0 0
        %1058 = vmatprep.subr.bf16.mxu0 0
        %1059 = vmatpush1.bf16.msra.mxu0 0
        %1060 = vmatprep.subr.bf16.mxu0 0
        %1061 = vmatpush1.bf16.msra.mxu0 0
        %1062 = vmatprep.subr.bf16.mxu0 0
        %1063 = vmatpush1.bf16.msra.mxu0 0
        %1064 = vmatprep.subr.bf16.mxu0 0
        %1065 = vmatpush1.bf16.msra.mxu0 0
        %1066 = vmatprep.subr.bf16.mxu0 0
        %1067 = vmatpush1.bf16.msra.mxu0 0
        %1068 = vmatprep.subr.bf16.mxu0 0
        %1069 = vmatpush1.bf16.msra.mxu0 0
        %1070 = vmatprep.subr.bf16.mxu0 0
        %1071 = vmatpush1.bf16.msra.mxu0 0
        %1072 = vmatprep.subr.bf16.mxu0 0
        %1073 = vmatpush1.bf16.msra.mxu0 0
        %1074 = vmatprep.subr.bf16.mxu0 0
        %1075 = vmatpush1.bf16.msra.mxu0 0
        %1076 = vmatprep.subr.bf16.mxu0 0
        %1077 = vmatpush1.bf16.msra.mxu0 0
        %1078 = vmatprep.subr.bf16.mxu0 0
        %1079 = vmatpush1.bf16.msra.mxu0 0
        %1080 = vmatprep.subr.bf16.mxu0 0
        %1081 = vmatpush1.bf16.msra.mxu0 0
        %1082 = vmatprep.subr.bf16.mxu0 0
        %1083 = vmatpush1.bf16.msra.mxu0 0
        %1084 = vmatprep.subr.bf16.mxu0 0
        %1085 = vmatpush1.bf16.msra.mxu0 0
        %1086 = vmatprep.mubr.bf16.mxu0 0
        %1087 = vmatmul.mubr.bf16.gmra.mrb[0].mxu0 %v1002
        %v1088 = vpop.f32.mrb[0].mxu0
        %v1089 = vadd.f32 0.0, %v1088
        %v1090 = vpop.f32.mrb[0].mxu0
        %v1091 = vpop.f32.mrb[0].mxu0
        %v1092 = vpop.f32.mrb[0].mxu0
        %1093 = vdwg.mxu0
        %v1094 = vadd.f32 %v965, %v1048
        %v1095 = vadd.f32 %v966, %v1050
        %v1096 = vadd.f32 %v967, %v1089
        %v1097 = vld [vmem:[%s195] sm:$0xff]
        %1098 = vrot.lane.b32.xlu0 %v214, 100
        %v1099 = vpop.permute.xlu0 %1098
        %v1101 = vcombine.high %v1097, %v1097
        %v1103 = vunpack.c.l.s4 1983009808
        %v1104 = vunpack.c.0.s8 %v1103
        %v1105 = vlaneseq
        %v1106 = vshrl.u32 %v1105, 7
        %v1107 = vsub.s32 %v1104, %v1106
        %v1108 = vrot.slane %v1097, %v1107
        %v1110 = vunpack.c.l.s4 1983009808
        %v1111 = vunpack.c.0.s8 %v1110
        %v1112 = vlaneseq
        %v1113 = vshrl.u32 %v1112, 7
        %v1114 = vsub.s32 %v1111, %v1113
        %v1115 = vrot.slane %v1101, %v1114
        %v1116 = vcombine.high %v1108, %v1108
        %v1117 = vcombine.high %v1115, %v1115
        %1118 = vrot.lane.b32.xlu0 %v1108, 91
        %v1119 = vpop.permute.xlu0 %1118
        %1120 = vrot.lane.b32.xlu0 %v1116, 91
        %v1121 = vpop.permute.xlu0 %1120
        %1122 = vrot.lane.b32.xlu0 %v1115, 91
        %v1123 = vpop.permute.xlu0 %1122
        %1124 = vrot.lane.b32.xlu0 %v1117, 91
        %v1125 = vpop.permute.xlu0 %1124
        %vm1126 = vcmask 744448
        %v1127 = vsel %vm1126, %v1119, %v1121
        %v1128 = vsel %vm1126, %v1121, %v1123
        %v1129 = vsel %vm1126, %v1123, %v1125
        %v1131 = vsel %vm247, %v1099, 0
        %v1134 = vsel %vm251, %v1127, 0
        %v1137 = vsel %vm251, %v1128, 0
        %v1140 = vsel %vm251, %v1129, 0
        %1142 = vmatprep.subr.bf16.mxu0 %v1137
        %1143 = vmatpush1.bf16.msra.mxu0 %v1134
        %1144 = vmatprep.subr.bf16.mxu0 0
        %1145 = vmatpush1.bf16.msra.mxu0 0
        %1146 = vmatprep.subr.bf16.mxu0 0
        %1147 = vmatpush1.bf16.msra.mxu0 0
        %1148 = vmatprep.subr.bf16.mxu0 0
        %1149 = vmatpush1.bf16.msra.mxu0 0
        %1150 = vmatprep.subr.bf16.mxu0 0
        %1151 = vmatpush1.bf16.msra.mxu0 0
        %1152 = vmatprep.subr.bf16.mxu0 0
        %1153 = vmatpush1.bf16.msra.mxu0 0
        %1154 = vmatprep.subr.bf16.mxu0 0
        %1155 = vmatpush1.bf16.msra.mxu0 0
        %1156 = vmatprep.subr.bf16.mxu0 0
        %1157 = vmatpush1.bf16.msra.mxu0 0
        %1158 = vmatprep.subr.bf16.mxu0 0
        %1159 = vmatpush1.bf16.msra.mxu0 0
        %1160 = vmatprep.subr.bf16.mxu0 0
        %1161 = vmatpush1.bf16.msra.mxu0 0
        %1162 = vmatprep.subr.bf16.mxu0 0
        %1163 = vmatpush1.bf16.msra.mxu0 0
        %1164 = vmatprep.subr.bf16.mxu0 0
        %1165 = vmatpush1.bf16.msra.mxu0 0
        %1166 = vmatprep.subr.bf16.mxu0 0
        %1167 = vmatpush1.bf16.msra.mxu0 0
        %1168 = vmatprep.subr.bf16.mxu0 0
        %1169 = vmatpush1.bf16.msra.mxu0 0
        %1170 = vmatprep.subr.bf16.mxu0 0
        %1171 = vmatpush1.bf16.msra.mxu0 0
        %1172 = vmatprep.subr.bf16.mxu0 0
        %1173 = vmatpush1.bf16.msra.mxu0 0
        %1174 = vmatprep.mubr.bf16.mxu0 0
        %1175 = vmatmul.mubr.bf16.gmra.mrb[0].mxu0 %v1131
        %v1176 = vpop.f32.mrb[0].mxu0
        %v1177 = vadd.f32 0.0, %v1176
        %v1178 = vpop.f32.mrb[0].mxu0
        %v1179 = vadd.f32 0.0, %v1178
        %v1180 = vpop.f32.mrb[0].mxu0
        %v1181 = vpop.f32.mrb[0].mxu0
        %1182 = vdwg.mxu0
        %1183 = vmatprep.subr.bf16.mxu0 0
        %1184 = vmatpush1.bf16.msra.mxu0 %v1140
        %1185 = vmatprep.subr.bf16.mxu0 0
        %1186 = vmatpush1.bf16.msra.mxu0 0
        %1187 = vmatprep.subr.bf16.mxu0 0
        %1188 = vmatpush1.bf16.msra.mxu0 0
        %1189 = vmatprep.subr.bf16.mxu0 0
        %1190 = vmatpush1.bf16.msra.mxu0 0
        %1191 = vmatprep.subr.bf16.mxu0 0
        %1192 = vmatpush1.bf16.msra.mxu0 0
        %1193 = vmatprep.subr.bf16.mxu0 0
        %1194 = vmatpush1.bf16.msra.mxu0 0
        %1195 = vmatprep.subr.bf16.mxu0 0
        %1196 = vmatpush1.bf16.msra.mxu0 0
        %1197 = vmatprep.subr.bf16.mxu0 0
        %1198 = vmatpush1.bf16.msra.mxu0 0
        %1199 = vmatprep.subr.bf16.mxu0 0
        %1200 = vmatpush1.bf16.msra.mxu0 0
        %1201 = vmatprep.subr.bf16.mxu0 0
        %1202 = vmatpush1.bf16.msra.mxu0 0
        %1203 = vmatprep.subr.bf16.mxu0 0
        %1204 = vmatpush1.bf16.msra.mxu0 0
        %1205 = vmatprep.subr.bf16.mxu0 0
        %1206 = vmatpush1.bf16.msra.mxu0 0
        %1207 = vmatprep.subr.bf16.mxu0 0
        %1208 = vmatpush1.bf16.msra.mxu0 0
        %1209 = vmatprep.subr.bf16.mxu0 0
        %1210 = vmatpush1.bf16.msra.mxu0 0
        %1211 = vmatprep.subr.bf16.mxu0 0
        %1212 = vmatpush1.bf16.msra.mxu0 0
        %1213 = vmatprep.subr.bf16.mxu0 0
        %1214 = vmatpush1.bf16.msra.mxu0 0
        %1215 = vmatprep.mubr.bf16.mxu0 0
        %1216 = vmatmul.mubr.bf16.gmra.mrb[0].mxu0 %v1131
        %v1217 = vpop.f32.mrb[0].mxu0
        %v1218 = vadd.f32 0.0, %v1217
        %v1219 = vpop.f32.mrb[0].mxu0
        %v1220 = vpop.f32.mrb[0].mxu0
        %v1221 = vpop.f32.mrb[0].mxu0
        %1222 = vdwg.mxu0
        %v1223 = vadd.f32 %v1094, %v1177
        %v1224 = vadd.f32 %v1095, %v1179
        %v1225 = vadd.f32 %v1096, %v1218
        %v1226 = vld [vmem:[%s195] sm:$0xff]
        %1227 = vrot.lane.b32.xlu0 %v214, 96
        %v1228 = vpop.permute.xlu0 %1227
        %v1230 = vcombine.high %v1226, %v1226
        %v1232 = vunpack.c.l.s4 1983009808
        %v1233 = vunpack.c.0.s8 %v1232
        %v1234 = vlaneseq
        %v1235 = vshrl.u32 %v1234, 7
        %v1236 = vsub.s32 %v1233, %v1235
        %v1237 = vrot.slane %v1226, %v1236
        %v1239 = vunpack.c.l.s4 1983009808
        %v1240 = vunpack.c.0.s8 %v1239
        %v1241 = vlaneseq
        %v1242 = vshrl.u32 %v1241, 7
        %v1243 = vsub.s32 %v1240, %v1242
        %v1244 = vrot.slane %v1230, %v1243
        %v1245 = vcombine.high %v1237, %v1237
        %v1246 = vcombine.high %v1244, %v1244
        %1247 = vrot.lane.b32.xlu0 %v1237, 90
        %v1248 = vpop.permute.xlu0 %1247
        %1249 = vrot.lane.b32.xlu0 %v1245, 90
        %v1250 = vpop.permute.xlu0 %1249
        %1251 = vrot.lane.b32.xlu0 %v1244, 90
        %v1252 = vpop.permute.xlu0 %1251
        %1253 = vrot.lane.b32.xlu0 %v1246, 90
        %v1254 = vpop.permute.xlu0 %1253
        %vm1255 = vcmask 736256
        %v1256 = vsel %vm1255, %v1248, %v1250
        %v1257 = vsel %vm1255, %v1250, %v1252
        %v1258 = vsel %vm1255, %v1252, %v1254
        %v1260 = vsel %vm247, %v1228, 0
        %v1263 = vsel %vm251, %v1256, 0
        %v1266 = vsel %vm251, %v1257, 0
        %v1269 = vsel %vm251, %v1258, 0
        %1271 = vmatprep.subr.bf16.mxu0 %v1266
        %1272 = vmatpush1.bf16.msra.mxu0 %v1263
        %1273 = vmatprep.subr.bf16.mxu0 0
        %1274 = vmatpush1.bf16.msra.mxu0 0
        %1275 = vmatprep.subr.bf16.mxu0 0
        %1276 = vmatpush1.bf16.msra.mxu0 0
        %1277 = vmatprep.subr.bf16.mxu0 0
        %1278 = vmatpush1.bf16.msra.mxu0 0
        %1279 = vmatprep.subr.bf16.mxu0 0
        %1280 = vmatpush1.bf16.msra.mxu0 0
        %1281 = vmatprep.subr.bf16.mxu0 0
        %1282 = vmatpush1.bf16.msra.mxu0 0
        %1283 = vmatprep.subr.bf16.mxu0 0
        %1284 = vmatpush1.bf16.msra.mxu0 0
        %1285 = vmatprep.subr.bf16.mxu0 0
        %1286 = vmatpush1.bf16.msra.mxu0 0
        %1287 = vmatprep.subr.bf16.mxu0 0
        %1288 = vmatpush1.bf16.msra.mxu0 0
        %1289 = vmatprep.subr.bf16.mxu0 0
        %1290 = vmatpush1.bf16.msra.mxu0 0
        %1291 = vmatprep.subr.bf16.mxu0 0
        %1292 = vmatpush1.bf16.msra.mxu0 0
        %1293 = vmatprep.subr.bf16.mxu0 0
        %1294 = vmatpush1.bf16.msra.mxu0 0
        %1295 = vmatprep.subr.bf16.mxu0 0
        %1296 = vmatpush1.bf16.msra.mxu0 0
        %1297 = vmatprep.subr.bf16.mxu0 0
        %1298 = vmatpush1.bf16.msra.mxu0 0
        %1299 = vmatprep.subr.bf16.mxu0 0
        %1300 = vmatpush1.bf16.msra.mxu0 0
        %1301 = vmatprep.subr.bf16.mxu0 0
        %1302 = vmatpush1.bf16.msra.mxu0 0
        %1303 = vmatprep.mubr.bf16.mxu0 0
        %1304 = vmatmul.mubr.bf16.gmra.mrb[0].mxu0 %v1260
        %v1305 = vpop.f32.mrb[0].mxu0
        %v1306 = vadd.f32 0.0, %v1305
        %v1307 = vpop.f32.mrb[0].mxu0
        %v1308 = vadd.f32 0.0, %v1307
        %v1309 = vpop.f32.mrb[0].mxu0
        %v1310 = vpop.f32.mrb[0].mxu0
        %1311 = vdwg.mxu0
        %1312 = vmatprep.subr.bf16.mxu0 0
        %1313 = vmatpush1.bf16.msra.mxu0 %v1269
        %1314 = vmatprep.subr.bf16.mxu0 0
        %1315 = vmatpush1.bf16.msra.mxu0 0
        %1316 = vmatprep.subr.bf16.mxu0 0
        %1317 = vmatpush1.bf16.msra.mxu0 0
        %1318 = vmatprep.subr.bf16.mxu0 0
        %1319 = vmatpush1.bf16.msra.mxu0 0
        %1320 = vmatprep.subr.bf16.mxu0 0
        %1321 = vmatpush1.bf16.msra.mxu0 0
        %1322 = vmatprep.subr.bf16.mxu0 0
        %1323 = vmatpush1.bf16.msra.mxu0 0
        %1324 = vmatprep.subr.bf16.mxu0 0
        %1325 = vmatpush1.bf16.msra.mxu0 0
        %1326 = vmatprep.subr.bf16.mxu0 0
        %1327 = vmatpush1.bf16.msra.mxu0 0
        %1328 = vmatprep.subr.bf16.mxu0 0
        %1329 = vmatpush1.bf16.msra.mxu0 0
        %1330 = vmatprep.subr.bf16.mxu0 0
        %1331 = vmatpush1.bf16.msra.mxu0 0
        %1332 = vmatprep.subr.bf16.mxu0 0
        %1333 = vmatpush1.bf16.msra.mxu0 0
        %1334 = vmatprep.subr.bf16.mxu0 0
        %1335 = vmatpush1.bf16.msra.mxu0 0
        %1336 = vmatprep.subr.bf16.mxu0 0
        %1337 = vmatpush1.bf16.msra.mxu0 0
        %1338 = vmatprep.subr.bf16.mxu0 0
        %1339 = vmatpush1.bf16.msra.mxu0 0
        %1340 = vmatprep.subr.bf16.mxu0 0
        %1341 = vmatpush1.bf16.msra.mxu0 0
        %1342 = vmatprep.subr.bf16.mxu0 0
        %1343 = vmatpush1.bf16.msra.mxu0 0
        %1344 = vmatprep.mubr.bf16.mxu0 0
        %1345 = vmatmul.mubr.bf16.gmra.mrb[0].mxu0 %v1260
        %v1346 = vpop.f32.mrb[0].mxu0
        %v1347 = vadd.f32 0.0, %v1346
        %v1348 = vpop.f32.mrb[0].mxu0
        %v1349 = vpop.f32.mrb[0].mxu0
        %v1350 = vpop.f32.mrb[0].mxu0
        %1351 = vdwg.mxu0
        %v1352 = vadd.f32 %v1223, %v1306
        %v1353 = vadd.f32 %v1224, %v1308
        %v1354 = vadd.f32 %v1225, %v1347
        %v1355 = vmul.f32 %v1352, %v202
        %v1356 = vmul.f32 %v1353, %v202
        %v1357 = vmul.f32 %v1354, %v202
        %v1358 = vadd.f32 %v1355, %v208
        %v1359 = vadd.f32 %v1356, %v208
        %v1360 = vadd.f32 %v1357, %v208
        %v1361 = vmax.f32 %v1358, 0.0
        %v1362 = vmax.f32 %v1359, 0.0
        %v1363 = vmax.f32 %v1360, 0.0
        %1364 = vst [vmem:[%s190] sm:$0xff] %v1361
        %1365 = vst [vmem:[%s190 + $0x8] sm:$0xff] %v1362
        %1366 = vst [vmem:[%s190 + $0x10] sm:$0xff] %v1363
        %s1367 = sand.u32 %s115, 1
        %s1368 = scalar_lea.sflag [#allocation3], %s1367
        %s1369 = sand.u32 %s115, 1
        %s1370 = smul.addr %s1369, 24
        %s1371 = scalar_lea.vmem [#allocation2], %s1370
        // Predicated region
        $region37: #{tpu_custom_call.1} parent=35 // pred_check
          %p1372 = pneg %p125
        $region38: #{tpu_custom_call.1} parent=35 // pred_check_branch
          %1374 = sbr.rel (%p1372) target = $region40
        $region39: #{tpu_custom_call.1} parent=35 // pred_region
          %s1376 = ssub.s32 384, 384
          %1377 = vsyncadd %s1368, %s1376
          %s1378 = smul.addr %s18, 3
          %s1379 = smul.addr %s1378, 128
          %s1380 = scalar_lea.hbm %s4, %s1379
          %s1382 = sshll.u32 %s1371, 4
          %s1383 = int_to_ptr.vmem [resolvable:$true] %s1382
          %1385 = dma.vmem_to_hbm [thread:$0]  %s1383, 384, %s1380, %s1368
        $region40: #{tpu_custom_call.1} parent=35 // pred_fallthru
          _
      $region36: #{tpu_custom_call.1} parent=5 // pred_fallthru
        _
      %p1386 = scmp.le.s32.totalorder 2, %s13
      // Predicated region
      $region41: #{tpu_custom_call.1} parent=5 // pred_check
        %p1387 = pneg %p1386
      $region42: #{tpu_custom_call.1} parent=5 // pred_check_branch
        %1389 = sbr.rel (%p1387) target = $region44
      $region43: #{tpu_custom_call.1} parent=5 // pred_region
        %s1390 = ssub.s32 %s13, 2
        // Predicated region
        $region45: #{tpu_custom_call.1} parent=43 // pred_check
          %p1391 = pneg %p131
        $region46: #{tpu_custom_call.1} parent=43 // pred_check_branch
          %1393 = sbr.rel (%p1391) target = $region48
        $region47: #{tpu_custom_call.1} parent=43 // pred_region
          %s1394 = sand.u32 %s116, 1
          %s1395 = scalar_lea.sflag [#allocation3], %s1394
          %s1396 = sand.u32 %s116, 1
          %s1397 = smul.addr %s1396, 24
          %s1398 = scalar_lea.vmem [#allocation2], %s1397
          %1399 = dma.done %s1395, 384
        $region48: #{tpu_custom_call.1} parent=43 // pred_fallthru
          _
      $region44: #{tpu_custom_call.1} parent=5 // pred_fallthru
        _
    $region6: #{tpu_custom_call.1} parent=1 // loop_footer
      %s17 = sadd.s32 1, %s13
    $region7: #{tpu_custom_call.1} parent=1 // loop_footer_branch
      %12 = sbr.rel target = $region3
    $region8: #{tpu_custom_call.1} parent=1 // loop_exit
      _
    %1400 = vsyncpa [#allocation3], 1
    %s1401 = scalar_lea.sflag [#allocation3], 1
    %1402 = vsyncpa %s1401, 1

</llo_original>
